<compile_context>
chip_gen: v7x
topology: tpu7x:2x2x1
jax: 0.10.0
libtpu: 0.0.40
codegen_flags: <defaults>
</compile_context>

<pallas_src>
import functools

import jax
import jax.numpy as jnp
from jax.experimental import pallas as pl
from jax.experimental.pallas import tpu as pltpu


def edge_node_mp_kernel(rc_ref, ea_ref, xw1h_ref, xw1l_ref, w1e_ref, b1_ref,
                        w2a_ref, b2a_ref, node_part_ref, edge_out_ref, acc_ref):
    """One (core c, edge-tile i) grid step; everything is lane-dense in TILE_E."""
    i = pl.program_id(1)

    @pl.when(i == 0)
    def _init():
        acc_ref[...] = jnp.zeros_like(acc_ref)

    n_nodes = acc_ref.shape[1]
    inter = edge_out_ref.shape[0]
    te = ea_ref.shape[1]

    rc = rc_ref[...]                                    # (2, TILE_E) int32
    row = rc[0:1, :]                                    # (1, TILE_E)
    col = rc[1:2, :]                                    # (1, TILE_E)

    # Shared node-id iota (N, TILE_E): one iota, two compares.
    node_iota = jax.lax.broadcasted_iota(jnp.int32, (n_nodes, te), 0)
    row_oh = (node_iota == row).astype(jnp.bfloat16)    # 0/1 exact in bf16
    col_oh = (node_iota == col).astype(jnp.float32)     # padded edges: col == N -> zero column

    # ---- edge MLP, transposed (features on sublanes, TILE_E on lanes) ------
    # gather x[row] @ w1_node via one-hot MXU matmul; xw1 carried as a bf16
    # hi/lo split so the dot runs at bf16 MXU rate but reconstructs ~f32.
    h = jnp.dot(xw1h_ref[...], row_oh, preferred_element_type=jnp.float32)
    h = h + jnp.dot(xw1l_ref[...], row_oh, preferred_element_type=jnp.float32)
    h = h + jnp.dot(w1e_ref[...], ea_ref[...], preferred_element_type=jnp.float32)
    h = jnp.maximum(h + b1_ref[...], 0.0)               # (hid, TILE_E)

    # second layer; w2a/b2a carry an extra zero-weight / one-bias "count" row.
    edge_aug = jnp.dot(w2a_ref[...], h, preferred_element_type=jnp.float32)
    edge_aug = edge_aug + b2a_ref[...]                   # (inter+1, TILE_E)
    edge_out_ref[...] = edge_aug[:inter, :].astype(edge_out_ref.dtype)   # lane-dense store

    # ---- fused f32 scatter-sum + count over col -----------------------------
    # (inter+1, TILE_E) x (N, TILE_E)^T -> (inter+1, N); count row stays exact.
    acc_ref[...] += jax.lax.dot_general(
        edge_aug, col_oh, (((1,), (1,)), ((), ())),
        preferred_element_type=jnp.float32)

    @pl.when(i == pl.num_programs(1) - 1)
    def _finalize():
        node_part_ref[0] = acc_ref[...]


@functools.partial(jax.jit, static_argnames=("tile_e", "num_cores"))
def edge_node_mp(x, edge_index, edge_attr, w1, b1, w2, b2, *,
                 tile_e=512, num_cores=2):
    """JAX/Pallas equivalent of EdgeNodeMP.forward (reduce='mean')."""
    n, node_dim = x.shape
    e, edge_dim = edge_attr.shape
    hid = w1.shape[1]
    inter = w2.shape[1]
    hp = jax.lax.Precision.HIGHEST

    # Node-side first-layer term (tiny), then bf16 hi/lo split for the gather.
    xw1_t = jnp.dot(x.astype(jnp.float32), w1[:node_dim].astype(jnp.float32),
                    precision=hp).T                                   # (hid, N)
    xw1_hi = xw1_t.astype(jnp.bfloat16)
    xw1_lo = (xw1_t - xw1_hi.astype(jnp.float32)).astype(jnp.bfloat16)

    w1e_t = w1[node_dim:].T.astype(jnp.float32)                       # (hid, edge_dim)
    b1_t = b1.reshape(hid, 1).astype(jnp.float32)

    # w2/b2 transposed + augmented with a count row (weights 0, bias 1).
    w2a_t = jnp.concatenate(
        [w2.T, jnp.zeros((1, hid), w2.dtype)], axis=0).astype(jnp.float32)   # (inter+1, hid)
    b2a_t = jnp.concatenate(
        [b2, jnp.ones((1,), b2.dtype)]).reshape(inter + 1, 1).astype(jnp.float32)

    row = edge_index[0].astype(jnp.int32)
    col = edge_index[1].astype(jnp.int32)
    ea_t = edge_attr.astype(jnp.float32).T                            # (edge_dim, E)

    # Pad E to a multiple of (num_cores * tile_e); padded edges get col == n
    # (no one-hot match -> no scatter contribution); their edge rows are sliced off.
    chunk = num_cores * tile_e
    e_pad = pl.cdiv(e, chunk) * chunk
    pad = e_pad - e
    if pad:
        row = jnp.concatenate([row, jnp.zeros((pad,), jnp.int32)])
        col = jnp.concatenate([col, jnp.full((pad,), n, jnp.int32)])
        ea_t = jnp.concatenate([ea_t, jnp.zeros((edge_dim, pad), ea_t.dtype)], axis=1)
    rc = jnp.stack([row, col], axis=0)                                # (2, e_pad)

    tpc = e_pad // chunk                                              # tiles per core
    grid = (num_cores, tpc)

    def edge_idx(c, i):
        return (0, c * tpc + i)

    def const_idx(c, i):
        return (0, 0)

    flops = e_pad * (4 * hid * n + 2 * hid * edge_dim
                     + 2 * (inter + 1) * hid + 2 * (inter + 1) * n)
    bytes_accessed = (e_pad * (8 + 4 * edge_dim + 4 * inter)
                      + 2 * 2 * hid * n
                      + 4 * (hid * edge_dim + hid + (inter + 1) * hid + (inter + 1))
                      + 4 * num_cores * (inter + 1) * n)

    node_part, edge_out_t = pl.pallas_call(
        edge_node_mp_kernel,
        out_shape=(
            jax.ShapeDtypeStruct((num_cores, inter + 1, n), jnp.float32),  # per-core partials
            jax.ShapeDtypeStruct((inter, e_pad), jnp.float32),             # edge_new, transposed
        ),
        grid_spec=pltpu.PrefetchScalarGridSpec(
            num_scalar_prefetch=0,
            grid=grid,
            in_specs=[
                pl.BlockSpec((2, tile_e), edge_idx),                 # packed row/col
                pl.BlockSpec((edge_dim, tile_e), edge_idx),          # edge_attr^T
                pl.BlockSpec((hid, n), const_idx),                   # xw1 hi (bf16, resident)
                pl.BlockSpec((hid, n), const_idx),                   # xw1 lo (bf16, resident)
                pl.BlockSpec((hid, edge_dim), const_idx),            # w1_edge^T
                pl.BlockSpec((hid, 1), const_idx),                   # b1
                pl.BlockSpec((inter + 1, hid), const_idx),           # w2_aug^T
                pl.BlockSpec((inter + 1, 1), const_idx),             # b2_aug
            ],
            out_specs=(
                pl.BlockSpec((1, inter + 1, n), lambda c, i: (c, 0, 0)),   # per-core node partial
                pl.BlockSpec((inter, tile_e), edge_idx),                   # edge_new^T tile
            ),
            scratch_shapes=[pltpu.VMEM((inter + 1, n), jnp.float32)],
        ),
        compiler_params=pltpu.CompilerParams(
            dimension_semantics=("parallel", "arbitrary"),
            vmem_limit_bytes=48 * 1024 * 1024,     # leaves headroom on v7x's 64 MiB
        ),
        cost_estimate=pl.CostEstimate(
            flops=flops, transcendentals=0, bytes_accessed=bytes_accessed),
    )(rc, ea_t, xw1_hi, xw1_lo, w1e_t, b1_t, w2a_t, b2a_t)

    # Combine per-core partials; exact mean divide (review: no approx reciprocal here).
    part = node_part.sum(axis=0)                 # (inter+1, N)
    sums = part[:inter, :]
    counts = part[inter, :]
    node_new = (sums / jnp.maximum(counts, 1.0)).T      # (N, inter)
    edge_new = edge_out_t[:, :e].T                      # (E, inter)
    return node_new, edge_new


def reference(x, edge_index, edge_attr, w1, b1, w2, b2):
    hp = jax.lax.Precision.HIGHEST
    row, col = edge_index[0], edge_index[1]
    n = x.shape[0]
    edge_in = jnp.concatenate([x[row], edge_attr], axis=-1)
    h = jnp.maximum(jnp.dot(edge_in, w1, precision=hp) + b1, 0.0)
    edge_new = jnp.dot(h, w2, precision=hp) + b2
    sums = jnp.zeros((n, edge_new.shape[1]), jnp.float32).at[col].add(edge_new)
    counts = jnp.zeros((n,), jnp.float32).at[col].add(1.0)
    node_new = sums / jnp.maximum(counts, 1.0)[:, None]
    return node_new, edge_new


if __name__ == "__main__":
    node_dim, edge_dim, hid_dim, inter_dim = 8, 8, 32, 16
    # grid = (2 cores, 2 edge tiles) at tile_e=512 -> exercises the resident
    # accumulator, the per-core partial combine, and the padding path.
    N, E = 64, 1900

    key = jax.random.PRNGKey(0)
    k_x, k_ea, k_ei, k_w1, k_b1, k_w2, k_b2 = jax.random.split(key, 7)

    x = jax.random.normal(k_x, (N, node_dim), dtype=jnp.float32)
    edge_attr = jax.random.normal(k_ea, (E, edge_dim), dtype=jnp.float32)
    edge_index = jax.random.randint(k_ei, (2, E), 0, N, dtype=jnp.int32)

    d_in = node_dim + edge_dim
    w1 = jax.random.normal(k_w1, (d_in, hid_dim), dtype=jnp.float32) * 0.1
    b1 = jax.random.normal(k_b1, (hid_dim,), dtype=jnp.float32) * 0.1
    w2 = jax.random.normal(k_w2, (hid_dim, inter_dim), dtype=jnp.float32) * 0.1
    b2 = jax.random.normal(k_b2, (inter_dim,), dtype=jnp.float32) * 0.1

    node_new, edge_new = edge_node_mp(x, edge_index, edge_attr, w1, b1, w2, b2)
    jax.block_until_ready((node_new, edge_new))

    node_ref, edge_ref = reference(x, edge_index, edge_attr, w1, b1, w2, b2)
    assert node_new.shape == (N, inter_dim) and edge_new.shape == (E, inter_dim)
    # edge MLP: f32 dots + bf16 hi/lo gather (~2^-18 rel) -> tight tolerance.
    assert jnp.allclose(edge_new, edge_ref, atol=5e-4, rtol=5e-4), \
        float(jnp.max(jnp.abs(edge_new - edge_ref)))
    # node path: f32 scatter + exact counts + exact divide.
    assert jnp.allclose(node_new, node_ref, atol=2e-3, rtol=2e-3), \
        float(jnp.max(jnp.abs(node_new - node_ref)))

    print("KERNEL_OK")
</pallas_src>

<mosaic_0001>
module attributes {stable_mosaic.version = 11 : i64} {
  func.func @edge_node_mp_kernel(%arg0: i32, %arg1: i32, %arg2: memref<2x512xi32, #tpu.memory_space<vmem>>, %arg3: memref<8x512xf32, #tpu.memory_space<vmem>>, %arg4: memref<32x64xbf16, #tpu.memory_space<vmem>>, %arg5: memref<32x64xbf16, #tpu.memory_space<vmem>>, %arg6: memref<32x8xf32, #tpu.memory_space<vmem>>, %arg7: memref<32x1xf32, #tpu.memory_space<vmem>>, %arg8: memref<17x32xf32, #tpu.memory_space<vmem>>, %arg9: memref<17x1xf32, #tpu.memory_space<vmem>>, %arg10: memref<1x17x64xf32, #tpu.memory_space<vmem>>, %arg11: memref<16x512xf32, #tpu.memory_space<vmem>>, %arg12: memref<17x64xf32, #tpu.memory_space<vmem>>) attributes {dimension_semantics = [#tpu.dimension_semantics<parallel>, #tpu.dimension_semantics<arbitrary>], iteration_bounds = array<i64: 2, 2>, scalar_prefetch = 0 : i64, scratch_operands = 1 : i64, tpu.core_type = #tpu.core_type<tc>, window_params = [{transform_indices = @transform_0, window_bounds = array<i64: 2, 512>}, {transform_indices = @transform_1, window_bounds = array<i64: 8, 512>}, {pipeline_mode = #tpu.pipeline_mode<synchronous>, transform_indices = @transform_2, window_bounds = array<i64: 32, 64>}, {pipeline_mode = #tpu.pipeline_mode<synchronous>, transform_indices = @transform_3, window_bounds = array<i64: 32, 64>}, {pipeline_mode = #tpu.pipeline_mode<synchronous>, transform_indices = @transform_4, window_bounds = array<i64: 32, 8>}, {pipeline_mode = #tpu.pipeline_mode<synchronous>, transform_indices = @transform_5, window_bounds = array<i64: 32, 1>}, {pipeline_mode = #tpu.pipeline_mode<synchronous>, transform_indices = @transform_6, window_bounds = array<i64: 17, 32>}, {pipeline_mode = #tpu.pipeline_mode<synchronous>, transform_indices = @transform_7, window_bounds = array<i64: 17, 1>}, {transform_indices = @transform_8, window_bounds = array<i64: 1, 17, 64>}, {transform_indices = @transform_9, window_bounds = array<i64: 16, 512>}]} {
    %c0_i32 = arith.constant 0 : i32
    %0 = arith.cmpi eq, %arg1, %c0_i32 : i32
    %1 = arith.extui %0 : i1 to i32
    %c0_i32_0 = arith.constant 0 : i32
    %2 = arith.cmpi ne, %1, %c0_i32_0 : i32
    scf.if %2 {
      %cst_28 = arith.constant 0.000000e+00 : f32
      %44 = vector.broadcast %cst_28 : f32 to vector<17x64xf32>
      %c0_29 = arith.constant 0 : index
      %c0_30 = arith.constant 0 : index
      %45 = vector.load %arg12[%c0_29, %c0_30] : memref<17x64xf32, #tpu.memory_space<vmem>>, vector<17x64xf32>
      tpu.vector_store %arg12[%c0_29, %c0_30], %44 {strides = array<i32>} : memref<17x64xf32, #tpu.memory_space<vmem>>, vector<17x64xf32>,
    } else {
    }
    %c0 = arith.constant 0 : index
    %c0_1 = arith.constant 0 : index
    %3 = vector.load %arg2[%c0, %c0_1] : memref<2x512xi32, #tpu.memory_space<vmem>>, vector<2x512xi32>
    %4 = vector.extract_strided_slice %3 {offsets = [0, 0], sizes = [1, 512], strides = [1, 1]} : vector<2x512xi32> to vector<1x512xi32>
    %5 = vector.extract_strided_slice %3 {offsets = [1, 0], sizes = [1, 512], strides = [1, 1]} : vector<2x512xi32> to vector<1x512xi32>
    %6 = tpu.iota {dimensions = array<i32: 0>} : vector<64x512xi32>
    %7 = vector.broadcast %4 : vector<1x512xi32> to vector<64x512xi32>
    %8 = arith.cmpi eq, %6, %7 : vector<64x512xi32>
    %9 = arith.extui %8 : vector<64x512xi1> to vector<64x512xi32>
    %10 = arith.sitofp %9 : vector<64x512xi32> to vector<64x512xf32>
    %11 = arith.truncf %10 : vector<64x512xf32> to vector<64x512xbf16>
    %12 = vector.broadcast %5 : vector<1x512xi32> to vector<64x512xi32>
    %13 = arith.cmpi eq, %6, %12 : vector<64x512xi32>
    %14 = arith.extui %13 : vector<64x512xi1> to vector<64x512xi32>
    %15 = arith.sitofp %14 : vector<64x512xi32> to vector<64x512xf32>
    %c0_2 = arith.constant 0 : index
    %c0_3 = arith.constant 0 : index
    %16 = vector.load %arg4[%c0_2, %c0_3] : memref<32x64xbf16, #tpu.memory_space<vmem>>, vector<32x64xbf16>
    %cst = arith.constant dense<0.000000e+00> : vector<32x512xf32>
    %17 = tpu.matmul %16, %11, %cst {dimension_numbers = #tpu.dot_dimension_numbers<[1], [0], [0], [1], [0, 0, 1, 1], [], []>} : vector<32x64xbf16>, vector<64x512xbf16>, vector<32x512xf32> -> vector<32x512xf32>
    %c0_4 = arith.constant 0 : index
    %c0_5 = arith.constant 0 : index
    %18 = vector.load %arg5[%c0_4, %c0_5] : memref<32x64xbf16, #tpu.memory_space<vmem>>, vector<32x64xbf16>
    %cst_6 = arith.constant dense<0.000000e+00> : vector<32x512xf32>
    %19 = tpu.matmul %18, %11, %cst_6 {dimension_numbers = #tpu.dot_dimension_numbers<[1], [0], [0], [1], [0, 0, 1, 1], [], []>} : vector<32x64xbf16>, vector<64x512xbf16>, vector<32x512xf32> -> vector<32x512xf32>
    %20 = arith.addf %17, %19 : vector<32x512xf32>
    %c0_7 = arith.constant 0 : index
    %c0_8 = arith.constant 0 : index
    %21 = vector.load %arg6[%c0_7, %c0_8] : memref<32x8xf32, #tpu.memory_space<vmem>>, vector<32x8xf32>
    %c0_9 = arith.constant 0 : index
    %c0_10 = arith.constant 0 : index
    %22 = vector.load %arg3[%c0_9, %c0_10] : memref<8x512xf32, #tpu.memory_space<vmem>>, vector<8x512xf32>
    %cst_11 = arith.constant dense<0.000000e+00> : vector<32x512xf32>
    %23 = tpu.matmul %21, %22, %cst_11 {dimension_numbers = #tpu.dot_dimension_numbers<[1], [0], [0], [1], [0, 0, 1, 1], [], []>} : vector<32x8xf32>, vector<8x512xf32>, vector<32x512xf32> -> vector<32x512xf32>
    %24 = arith.addf %20, %23 : vector<32x512xf32>
    %c0_12 = arith.constant 0 : index
    %c0_13 = arith.constant 0 : index
    %25 = vector.load %arg7[%c0_12, %c0_13] : memref<32x1xf32, #tpu.memory_space<vmem>>, vector<32x1xf32>
    %26 = vector.broadcast %25 : vector<32x1xf32> to vector<32x512xf32>
    %27 = arith.addf %24, %26 : vector<32x512xf32>
    %cst_14 = arith.constant 0.000000e+00 : f32
    %28 = vector.broadcast %cst_14 : f32 to vector<32x512xf32>
    %29 = arith.maximumf %27, %28 : vector<32x512xf32>
    %c0_15 = arith.constant 0 : index
    %c0_16 = arith.constant 0 : index
    %30 = vector.load %arg8[%c0_15, %c0_16] : memref<17x32xf32, #tpu.memory_space<vmem>>, vector<17x32xf32>
    %cst_17 = arith.constant dense<0.000000e+00> : vector<17x512xf32>
    %31 = tpu.matmul %30, %29, %cst_17 {dimension_numbers = #tpu.dot_dimension_numbers<[1], [0], [0], [1], [0, 0, 1, 1], [], []>} : vector<17x32xf32>, vector<32x512xf32>, vector<17x512xf32> -> vector<17x512xf32>
    %c0_18 = arith.constant 0 : index
    %c0_19 = arith.constant 0 : index
    %32 = vector.load %arg9[%c0_18, %c0_19] : memref<17x1xf32, #tpu.memory_space<vmem>>, vector<17x1xf32>
    %33 = vector.broadcast %32 : vector<17x1xf32> to vector<17x512xf32>
    %34 = arith.addf %31, %33 : vector<17x512xf32>
    %35 = vector.extract_strided_slice %34 {offsets = [0, 0], sizes = [16, 512], strides = [1, 1]} : vector<17x512xf32> to vector<16x512xf32>
    %c0_20 = arith.constant 0 : index
    %c0_21 = arith.constant 0 : index
    %36 = vector.load %arg11[%c0_20, %c0_21] : memref<16x512xf32, #tpu.memory_space<vmem>>, vector<16x512xf32>
    tpu.vector_store %arg11[%c0_20, %c0_21], %35 {strides = array<i32>} : memref<16x512xf32, #tpu.memory_space<vmem>>, vector<16x512xf32>,
    %c0_22 = arith.constant 0 : index
    %c0_23 = arith.constant 0 : index
    %37 = vector.load %arg12[%c0_22, %c0_23] : memref<17x64xf32, #tpu.memory_space<vmem>>, vector<17x64xf32>
    %cst_24 = arith.constant dense<0.000000e+00> : vector<17x64xf32>
    %38 = tpu.matmul %34, %15, %cst_24 {dimension_numbers = #tpu.dot_dimension_numbers<[1], [1], [0], [0], [0, 0, 1, 0], [], []>} : vector<17x512xf32>, vector<64x512xf32>, vector<17x64xf32> -> vector<17x64xf32>
    %39 = arith.addf %37, %38 : vector<17x64xf32>
    %c0_25 = arith.constant 0 : index
    %c0_26 = arith.constant 0 : index
    %40 = vector.load %arg12[%c0_25, %c0_26] : memref<17x64xf32, #tpu.memory_space<vmem>>, vector<17x64xf32>
    tpu.vector_store %arg12[%c0_25, %c0_26], %39 {strides = array<i32>} : memref<17x64xf32, #tpu.memory_space<vmem>>, vector<17x64xf32>,
    %c1_i32 = arith.constant 1 : i32
    %41 = arith.cmpi eq, %arg1, %c1_i32 : i32
    %42 = arith.extui %41 : i1 to i32
    %c0_i32_27 = arith.constant 0 : i32
    %43 = arith.cmpi ne, %42, %c0_i32_27 : i32
    scf.if %43 {
      %c0_28 = arith.constant 0 : index
      %c0_29 = arith.constant 0 : index
      %44 = vector.load %arg12[%c0_28, %c0_29] : memref<17x64xf32, #tpu.memory_space<vmem>>, vector<17x64xf32>
      %c0_30 = arith.constant 0 : index
      %c0_31 = arith.constant 0 : index
      %c0_32 = arith.constant 0 : index
      %45 = vector.load %arg10[%c0_30, %c0_31, %c0_32] : memref<1x17x64xf32, #tpu.memory_space<vmem>>, vector<1x17x64xf32>
      %46 = vector.shape_cast %45 : vector<1x17x64xf32> to vector<17x64xf32>
      %47 = vector.shape_cast %44 : vector<17x64xf32> to vector<1x17x64xf32>
      tpu.vector_store %arg10[%c0_30, %c0_31, %c0_32], %47 {strides = array<i32>} : memref<1x17x64xf32, #tpu.memory_space<vmem>>, vector<1x17x64xf32>,
    } else {
    }
    return
  }
  func.func @transform_0(%arg0: i32, %arg1: i32) -> (i32, i32) {
    %c2_i32 = arith.constant 2 : i32
    %0 = arith.muli %arg0, %c2_i32 : i32
    %1 = arith.addi %0, %arg1 : i32
    %c0_i32 = arith.constant 0 : i32
    %c0_i32_0 = arith.constant 0 : i32
    return %c0_i32, %1 : i32, i32
  }
  func.func @transform_1(%arg0: i32, %arg1: i32) -> (i32, i32) {
    %c2_i32 = arith.constant 2 : i32
    %0 = arith.muli %arg0, %c2_i32 : i32
    %1 = arith.addi %0, %arg1 : i32
    %c0_i32 = arith.constant 0 : i32
    %c0_i32_0 = arith.constant 0 : i32
    return %c0_i32, %1 : i32, i32
  }
  func.func @transform_2(%arg0: i32, %arg1: i32) -> (i32, i32) {
    %c0_i32 = arith.constant 0 : i32
    %c0_i32_0 = arith.constant 0 : i32
    %c0_i32_1 = arith.constant 0 : i32
    return %c0_i32, %c0_i32_0 : i32, i32
  }
  func.func @transform_3(%arg0: i32, %arg1: i32) -> (i32, i32) {
    %c0_i32 = arith.constant 0 : i32
    %c0_i32_0 = arith.constant 0 : i32
    %c0_i32_1 = arith.constant 0 : i32
    return %c0_i32, %c0_i32_0 : i32, i32
  }
  func.func @transform_4(%arg0: i32, %arg1: i32) -> (i32, i32) {
    %c0_i32 = arith.constant 0 : i32
    %c0_i32_0 = arith.constant 0 : i32
    %c0_i32_1 = arith.constant 0 : i32
    return %c0_i32, %c0_i32_0 : i32, i32
  }
  func.func @transform_5(%arg0: i32, %arg1: i32) -> (i32, i32) {
    %c0_i32 = arith.constant 0 : i32
    %c0_i32_0 = arith.constant 0 : i32
    %c0_i32_1 = arith.constant 0 : i32
    return %c0_i32, %c0_i32_0 : i32, i32
  }
  func.func @transform_6(%arg0: i32, %arg1: i32) -> (i32, i32) {
    %c0_i32 = arith.constant 0 : i32
    %c0_i32_0 = arith.constant 0 : i32
    %c0_i32_1 = arith.constant 0 : i32
    return %c0_i32, %c0_i32_0 : i32, i32
  }
  func.func @transform_7(%arg0: i32, %arg1: i32) -> (i32, i32) {
    %c0_i32 = arith.constant 0 : i32
    %c0_i32_0 = arith.constant 0 : i32
    %c0_i32_1 = arith.constant 0 : i32
    return %c0_i32, %c0_i32_0 : i32, i32
  }
  func.func @transform_8(%arg0: i32, %arg1: i32) -> (i32, i32, i32) {
    %c0_i32 = arith.constant 0 : i32
    %c0_i32_0 = arith.constant 0 : i32
    %c0_i32_1 = arith.constant 0 : i32
    return %arg0, %c0_i32, %c0_i32_0 : i32, i32, i32
  }
  func.func @transform_9(%arg0: i32, %arg1: i32) -> (i32, i32) {
    %c2_i32 = arith.constant 2 : i32
    %0 = arith.muli %arg0, %c2_i32 : i32
    %1 = arith.addi %0, %arg1 : i32
    %c0_i32 = arith.constant 0 : i32
    %c0_i32_0 = arith.constant 0 : i32
    return %c0_i32, %1 : i32, i32
  }
}

</mosaic_0001>

<llo_original>
// kernel: edge_node_mp.1
$region0: #{edge_node_mp.1}
  #allocation0 [shape = 'u32[]', space=smem, size = 0x4, offset = 0x4, fixed_abs, tag = 'smem constant byte address 0x4 - core index']
  #allocation1 [shape = 'u32[144,128]{1,0:T(1,128)}', space=vmem, size = 0x12000, scoped, tag = 'internal scratch']
  #allocation2 [shape = 'f32[17,64]{1,0:T(8,128)}', space=vmem, size = 0x3000, scoped, tag = 'scratch operand']
  %s0 = inlined_call_operand.vmem [shape: s32[2,2048], index: 0, kind: input, shape index: {}]
  %s1 = inlined_call_operand.vmem [shape: f32[8,2048], index: 1, kind: input, shape index: {}]
  %s2 = inlined_call_operand.vmem [shape: bf16[32,64], index: 2, kind: input, shape index: {}]
  %s3 = inlined_call_operand.vmem [shape: bf16[32,64], index: 3, kind: input, shape index: {}]
  %s4 = inlined_call_operand.vmem [shape: f32[32,8], index: 4, kind: input, shape index: {}]
  %s5 = inlined_call_operand.vmem [shape: f32[32,1], index: 5, kind: input, shape index: {}]
  %s6 = inlined_call_operand.vmem [shape: f32[17,32], index: 6, kind: input, shape index: {}]
  %s7 = inlined_call_operand.vmem [shape: f32[17,1], index: 7, kind: input, shape index: {}]
  %s8 = inlined_call_operand.vmem [shape: f32[2,17,64], index: 8, kind: output, shape index: {0}]
  %s9 = inlined_call_operand.vmem [shape: f32[16,2048], index: 9, kind: output, shape index: {1}]
  %10 = xla_tuple %s8, %s9
  %s11 = sld [smem:[#allocation0]]
  $region100: #{edge_node_mp.1} parent=0
    _
  %s13 = ssub.s32 1, %s11
  %s14 = scalar_select 0, %s13, %s11
  $region1: #{edge_node_mp.1} parent=0
    #allocation3 [shape = 'u8[65536]{0}', space=vmem, size = 0x10000, scoped, tag = 'output window, operand 1']
    loop: start=0, step=1, limit=6
    $region2: #{edge_node_mp.1} parent=1 // loop_pre_header
      _
    $region3: #{edge_node_mp.1} parent=1 // loop_header
      %s16 = sphi 0, %s20
      %p17 = scmp.ge.s32.totalorder %s16, 6
      %s23 = sphi 0, %s35
      %s24 = sphi 0, %s31
      %s25 = sphi 0, %s23
      %s26 = sphi 0, %s24
      %s27 = sphi 0, %s25
      %s28 = sphi 0, %s26
      %s42 = sphi 0, %s44
      %s45 = sphi 0, %s42
      %s46 = sphi 0, %s45
      %s62 = sphi 0, %s46
      %s72 = sphi 0, %s74
      %s75 = sphi 0, %s72
      %s76 = sphi 0, %s75
      %s92 = sphi 0, %s76
      %s96 = sphi 0, %s96
      %s98 = sphi 0, %s96
      %s99 = sphi 0, %s98
      %s113 = sphi 0, %s99
      %s117 = sphi 0, %s117
      %s119 = sphi 0, %s117
      %s120 = sphi 0, %s119
      %s134 = sphi 0, %s120
      %s138 = sphi 0, %s138
      %s140 = sphi 0, %s138
      %s141 = sphi 0, %s140
      %s155 = sphi 0, %s141
      %s159 = sphi 0, %s159
      %s161 = sphi 0, %s159
      %s162 = sphi 0, %s161
      %s176 = sphi 0, %s162
      %s180 = sphi 0, %s180
      %s182 = sphi 0, %s180
      %s183 = sphi 0, %s182
      %s197 = sphi 0, %s183
      %s201 = sphi 0, %s201
      %s203 = sphi 0, %s201
      %s204 = sphi 0, %s203
      %s218 = sphi 0, %s204
      %s224 = sphi 0, %s226
      %s227 = sphi 0, %s224
      %s228 = sphi 0, %s227
      %s244 = sphi 0, %s228
      %s254 = sphi 0, %s256
      %s257 = sphi 0, %s254
      %s258 = sphi 0, %s257
      %s274 = sphi 0, %s258
    $region4: #{edge_node_mp.1} parent=1 // loop_header_branch
      %19 = sbr.rel (%p17) target = $region8
    $region5: #{edge_node_mp.1} parent=1 // loop_body
      %s21 = ssub.s32 %s16, 1
      %s22 = ssub.s32 %s16, 2
      %s29 = sadd.s32 1, %s24
      %p30 = scmp.ge.s32.totalorder %s29, 2
      %s31 = scalar_select %p30, 0, %s29
      %s32 = sadd.s32 1, %s23
      %s33 = scalar_select %p30, %s32, %s23
      %p34 = scmp.ge.s32.totalorder %s33, 2
      %s35 = scalar_select %p34, 0, %s33
      %s36 = smul.u32 %s23, 2
      %s37 = sadd.s32 %s36, %s24
      %s38 = smul.u32 %s35, 2
      %s39 = sadd.s32 %s38, %s31
      %s40 = ssub.s32 %s37, %s39
      %p41 = scmp.eq.s32.totalorder %s40, 0
      %s43 = sadd.s32 %s42, 1
      %s44 = scalar_select %p41, %s42, %s43
      %p47 = pneg %p41
      %p48 = scmp.eq.s32.totalorder %s16, 3
      %p49 = por %p47, %p48
      %p50 = scmp.ne.s32.totalorder %s42, %s45
      %p51 = scmp.eq.s32.totalorder %s16, 0
      %p52 = por %p50, %p51
      %p53 = scmp.ne.s32.totalorder %s42, %s45
      %p54 = scmp.eq.s32.totalorder %s21, 3
      %p55 = por %p53, %p54
      %p56 = scmp.ne.s32.totalorder %s45, %s46
      %p57 = scmp.eq.s32.totalorder %s21, 0
      %p58 = por %p56, %p57
      %p59 = scmp.ne.s32.totalorder %s45, %s46
      %p60 = scmp.eq.s32.totalorder %s22, 3
      %p61 = por %p59, %p60
      %p63 = scmp.ne.s32.totalorder %s46, %s62
      %p64 = scmp.eq.s32.totalorder %s22, 0
      %p65 = por %p63, %p64
      %s66 = smul.u32 %s23, 2
      %s67 = sadd.s32 %s66, %s24
      %s68 = smul.u32 %s35, 2
      %s69 = sadd.s32 %s68, %s31
      %s70 = ssub.s32 %s67, %s69
      %p71 = scmp.eq.s32.totalorder %s70, 0
      %s73 = sadd.s32 %s72, 1
      %s74 = scalar_select %p71, %s72, %s73
      %p77 = pneg %p71
      %p78 = scmp.eq.s32.totalorder %s16, 3
      %p79 = por %p77, %p78
      %p80 = scmp.ne.s32.totalorder %s72, %s75
      %p81 = scmp.eq.s32.totalorder %s16, 0
      %p82 = por %p80, %p81
      %p83 = scmp.ne.s32.totalorder %s72, %s75
      %p84 = scmp.eq.s32.totalorder %s21, 3
      %p85 = por %p83, %p84
      %p86 = scmp.ne.s32.totalorder %s75, %s76
      %p87 = scmp.eq.s32.totalorder %s21, 0
      %p88 = por %p86, %p87
      %p89 = scmp.ne.s32.totalorder %s75, %s76
      %p90 = scmp.eq.s32.totalorder %s22, 3
      %p91 = por %p89, %p90
      %p93 = scmp.ne.s32.totalorder %s76, %s92
      %p94 = scmp.eq.s32.totalorder %s22, 0
      %p95 = por %p93, %p94
      %s97 = sadd.s32 %s96, 1
      %p100 = scmp.eq.s32.totalorder %s16, 3
      %p101 = scmp.ne.s32.totalorder %s96, %s98
      %p102 = scmp.eq.s32.totalorder %s16, 0
      %p103 = por %p101, %p102
      %p104 = scmp.ne.s32.totalorder %s96, %s98
      %p105 = scmp.eq.s32.totalorder %s21, 3
      %p106 = por %p104, %p105
      %p107 = scmp.ne.s32.totalorder %s98, %s99
      %p108 = scmp.eq.s32.totalorder %s21, 0
      %p109 = por %p107, %p108
      %p110 = scmp.ne.s32.totalorder %s98, %s99
      %p111 = scmp.eq.s32.totalorder %s22, 3
      %p112 = por %p110, %p111
      %p114 = scmp.ne.s32.totalorder %s99, %s113
      %p115 = scmp.eq.s32.totalorder %s22, 0
      %p116 = por %p114, %p115
      %s118 = sadd.s32 %s117, 1
      %p121 = scmp.eq.s32.totalorder %s16, 3
      %p122 = scmp.ne.s32.totalorder %s117, %s119
      %p123 = scmp.eq.s32.totalorder %s16, 0
      %p124 = por %p122, %p123
      %p125 = scmp.ne.s32.totalorder %s117, %s119
      %p126 = scmp.eq.s32.totalorder %s21, 3
      %p127 = por %p125, %p126
      %p128 = scmp.ne.s32.totalorder %s119, %s120
      %p129 = scmp.eq.s32.totalorder %s21, 0
      %p130 = por %p128, %p129
      %p131 = scmp.ne.s32.totalorder %s119, %s120
      %p132 = scmp.eq.s32.totalorder %s22, 3
      %p133 = por %p131, %p132
      %p135 = scmp.ne.s32.totalorder %s120, %s134
      %p136 = scmp.eq.s32.totalorder %s22, 0
      %p137 = por %p135, %p136
      %s139 = sadd.s32 %s138, 1
      %p142 = scmp.eq.s32.totalorder %s16, 3
      %p143 = scmp.ne.s32.totalorder %s138, %s140
      %p144 = scmp.eq.s32.totalorder %s16, 0
      %p145 = por %p143, %p144
      %p146 = scmp.ne.s32.totalorder %s138, %s140
      %p147 = scmp.eq.s32.totalorder %s21, 3
      %p148 = por %p146, %p147
      %p149 = scmp.ne.s32.totalorder %s140, %s141
      %p150 = scmp.eq.s32.totalorder %s21, 0
      %p151 = por %p149, %p150
      %p152 = scmp.ne.s32.totalorder %s140, %s141
      %p153 = scmp.eq.s32.totalorder %s22, 3
      %p154 = por %p152, %p153
      %p156 = scmp.ne.s32.totalorder %s141, %s155
      %p157 = scmp.eq.s32.totalorder %s22, 0
      %p158 = por %p156, %p157
      %s160 = sadd.s32 %s159, 1
      %p163 = scmp.eq.s32.totalorder %s16, 3
      %p164 = scmp.ne.s32.totalorder %s159, %s161
      %p165 = scmp.eq.s32.totalorder %s16, 0
      %p166 = por %p164, %p165
      %p167 = scmp.ne.s32.totalorder %s159, %s161
      %p168 = scmp.eq.s32.totalorder %s21, 3
      %p169 = por %p167, %p168
      %p170 = scmp.ne.s32.totalorder %s161, %s162
      %p171 = scmp.eq.s32.totalorder %s21, 0
      %p172 = por %p170, %p171
      %p173 = scmp.ne.s32.totalorder %s161, %s162
      %p174 = scmp.eq.s32.totalorder %s22, 3
      %p175 = por %p173, %p174
      %p177 = scmp.ne.s32.totalorder %s162, %s176
      %p178 = scmp.eq.s32.totalorder %s22, 0
      %p179 = por %p177, %p178
      %s181 = sadd.s32 %s180, 1
      %p184 = scmp.eq.s32.totalorder %s16, 3
      %p185 = scmp.ne.s32.totalorder %s180, %s182
      %p186 = scmp.eq.s32.totalorder %s16, 0
      %p187 = por %p185, %p186
      %p188 = scmp.ne.s32.totalorder %s180, %s182
      %p189 = scmp.eq.s32.totalorder %s21, 3
      %p190 = por %p188, %p189
      %p191 = scmp.ne.s32.totalorder %s182, %s183
      %p192 = scmp.eq.s32.totalorder %s21, 0
      %p193 = por %p191, %p192
      %p194 = scmp.ne.s32.totalorder %s182, %s183
      %p195 = scmp.eq.s32.totalorder %s22, 3
      %p196 = por %p194, %p195
      %p198 = scmp.ne.s32.totalorder %s183, %s197
      %p199 = scmp.eq.s32.totalorder %s22, 0
      %p200 = por %p198, %p199
      %s202 = sadd.s32 %s201, 1
      %p205 = scmp.eq.s32.totalorder %s16, 3
      %p206 = scmp.ne.s32.totalorder %s201, %s203
      %p207 = scmp.eq.s32.totalorder %s16, 0
      %p208 = por %p206, %p207
      %p209 = scmp.ne.s32.totalorder %s201, %s203
      %p210 = scmp.eq.s32.totalorder %s21, 3
      %p211 = por %p209, %p210
      %p212 = scmp.ne.s32.totalorder %s203, %s204
      %p213 = scmp.eq.s32.totalorder %s21, 0
      %p214 = por %p212, %p213
      %p215 = scmp.ne.s32.totalorder %s203, %s204
      %p216 = scmp.eq.s32.totalorder %s22, 3
      %p217 = por %p215, %p216
      %p219 = scmp.ne.s32.totalorder %s204, %s218
      %p220 = scmp.eq.s32.totalorder %s22, 0
      %p221 = por %p219, %p220
      %s222 = ssub.s32 %s23, %s35
      %p223 = scmp.eq.s32.totalorder %s222, 0
      %s225 = sadd.s32 %s224, 1
      %s226 = scalar_select %p223, %s224, %s225
      %p229 = pneg %p223
      %p230 = scmp.eq.s32.totalorder %s16, 3
      %p231 = por %p229, %p230
      %p232 = scmp.ne.s32.totalorder %s224, %s227
      %p233 = scmp.eq.s32.totalorder %s16, 0
      %p234 = por %p232, %p233
      %p235 = scmp.ne.s32.totalorder %s224, %s227
      %p236 = scmp.eq.s32.totalorder %s21, 3
      %p237 = por %p235, %p236
      %p238 = scmp.ne.s32.totalorder %s227, %s228
      %p239 = scmp.eq.s32.totalorder %s21, 0
      %p240 = por %p238, %p239
      %p241 = scmp.ne.s32.totalorder %s227, %s228
      %p242 = scmp.eq.s32.totalorder %s22, 3
      %p243 = por %p241, %p242
      %p245 = scmp.ne.s32.totalorder %s228, %s244
      %p246 = scmp.eq.s32.totalorder %s22, 0
      %p247 = por %p245, %p246
      %s248 = smul.u32 %s23, 2
      %s249 = sadd.s32 %s248, %s24
      %s250 = smul.u32 %s35, 2
      %s251 = sadd.s32 %s250, %s31
      %s252 = ssub.s32 %s249, %s251
      %p253 = scmp.eq.s32.totalorder %s252, 0
      %s255 = sadd.s32 %s254, 1
      %s256 = scalar_select %p253, %s254, %s255
      %p259 = pneg %p253
      %p260 = scmp.eq.s32.totalorder %s16, 3
      %p261 = por %p259, %p260
      %p262 = scmp.ne.s32.totalorder %s254, %s257
      %p263 = scmp.eq.s32.totalorder %s16, 0
      %p264 = por %p262, %p263
      %p265 = scmp.ne.s32.totalorder %s254, %s257
      %p266 = scmp.eq.s32.totalorder %s21, 3
      %p267 = por %p265, %p266
      %p268 = scmp.ne.s32.totalorder %s257, %s258
      %p269 = scmp.eq.s32.totalorder %s21, 0
      %p270 = por %p268, %p269
      %p271 = scmp.ne.s32.totalorder %s257, %s258
      %p272 = scmp.eq.s32.totalorder %s22, 3
      %p273 = por %p271, %p272
      %p275 = scmp.ne.s32.totalorder %s258, %s274
      %p276 = scmp.eq.s32.totalorder %s22, 0
      %p277 = por %p275, %p276
      %p278 = scmp.le.s32.totalorder 1, %s16
      %p279 = scmp.lt.s32.totalorder %s16, 5
      %p280 = pnand %p278, %p279
      %p281 = pneg %p280
      // Predicated region
      $region9: #{edge_node_mp.1} parent=5 // pred_check
        _
      $region10: #{edge_node_mp.1} parent=5 // pred_check_branch
        %283 = sbr.rel (%p280) target = $region12
      $region11: #{edge_node_mp.1} parent=5 // pred_region
        %s284 = ssub.s32 %s16, 1
        // Predicated region
        $region13: #{edge_node_mp.1} parent=11 // pred_check
          %p285 = pneg %p109
        $region14: #{edge_node_mp.1} parent=11 // pred_check_branch
          %287 = sbr.rel (%p285) target = $region16
        $region15: #{edge_node_mp.1} parent=11 // pred_region
          _
        $region16: #{edge_node_mp.1} parent=11 // pred_fallthru
          _
        // Predicated region
        $region17: #{edge_node_mp.1} parent=11 // pred_check
          %p288 = pneg %p130
        $region18: #{edge_node_mp.1} parent=11 // pred_check_branch
          %290 = sbr.rel (%p288) target = $region20
        $region19: #{edge_node_mp.1} parent=11 // pred_region
          _
        $region20: #{edge_node_mp.1} parent=11 // pred_fallthru
          _
        // Predicated region
        $region21: #{edge_node_mp.1} parent=11 // pred_check
          %p291 = pneg %p151
        $region22: #{edge_node_mp.1} parent=11 // pred_check_branch
          %293 = sbr.rel (%p291) target = $region24
        $region23: #{edge_node_mp.1} parent=11 // pred_region
          _
        $region24: #{edge_node_mp.1} parent=11 // pred_fallthru
          _
        // Predicated region
        $region25: #{edge_node_mp.1} parent=11 // pred_check
          %p294 = pneg %p172
        $region26: #{edge_node_mp.1} parent=11 // pred_check_branch
          %296 = sbr.rel (%p294) target = $region28
        $region27: #{edge_node_mp.1} parent=11 // pred_region
          _
        $region28: #{edge_node_mp.1} parent=11 // pred_fallthru
          _
        // Predicated region
        $region29: #{edge_node_mp.1} parent=11 // pred_check
          %p297 = pneg %p193
        $region30: #{edge_node_mp.1} parent=11 // pred_check_branch
          %299 = sbr.rel (%p297) target = $region32
        $region31: #{edge_node_mp.1} parent=11 // pred_region
          _
        $region32: #{edge_node_mp.1} parent=11 // pred_fallthru
          _
        // Predicated region
        $region33: #{edge_node_mp.1} parent=11 // pred_check
          %p300 = pneg %p214
        $region34: #{edge_node_mp.1} parent=11 // pred_check_branch
          %302 = sbr.rel (%p300) target = $region36
        $region35: #{edge_node_mp.1} parent=11 // pred_region
          _
        $region36: #{edge_node_mp.1} parent=11 // pred_fallthru
          _
      $region12: #{edge_node_mp.1} parent=5 // pred_fallthru
        _
      %p303 = scmp.lt.s32.totalorder %s16, 4
      // Predicated region
      $region37: #{edge_node_mp.1} parent=5 // pred_check
        %p304 = pneg %p303
      $region38: #{edge_node_mp.1} parent=5 // pred_check_branch
        %306 = sbr.rel (%p304) target = $region40
      $region39: #{edge_node_mp.1} parent=5 // pred_region
        // Predicated region
        $region41: #{edge_node_mp.1} parent=39 // pred_check
          %p307 = pneg %p52
        $region42: #{edge_node_mp.1} parent=39 // pred_check_branch
          %309 = sbr.rel (%p307) target = $region44
        $region43: #{edge_node_mp.1} parent=39 // pred_region
          %s310 = smul.u32 %s23, 2
          %s311 = sadd.s32 %s310, %s24
          %s312 = smul.u32 4, %s311
          %p313 = scmp.lt.s32.totalorder %s312, 15
          %s314 = scalar_select %p313, %s312, 15
          %s315 = smul.addr %s314, 2
          %s316 = scalar_lea.vmem %s0, %s315
          %s317 = smul.u32 %s23, 2
          %s318 = sadd.s32 %s317, %s24
          %s319 = smul.u32 4, %s318
        $region44: #{edge_node_mp.1} parent=39 // pred_fallthru
          _
        // Predicated region
        $region45: #{edge_node_mp.1} parent=39 // pred_check
          %p320 = pneg %p82
        $region46: #{edge_node_mp.1} parent=39 // pred_check_branch
          %322 = sbr.rel (%p320) target = $region48
        $region47: #{edge_node_mp.1} parent=39 // pred_region
          %s323 = smul.u32 %s23, 2
          %s324 = sadd.s32 %s323, %s24
          %s325 = smul.u32 4, %s324
          %p326 = scmp.lt.s32.totalorder %s325, 15
          %s327 = scalar_select %p326, %s325, 15
          %s328 = smul.addr %s327, 8
          %s329 = scalar_lea.vmem %s1, %s328
          %s330 = smul.u32 %s23, 2
          %s331 = sadd.s32 %s330, %s24
          %s332 = smul.u32 4, %s331
        $region48: #{edge_node_mp.1} parent=39 // pred_fallthru
          _
      $region40: #{edge_node_mp.1} parent=5 // pred_fallthru
        _
      %p333 = scmp.le.s32.totalorder 1, %s16
      %p334 = scmp.lt.s32.totalorder %s16, 5
      %p335 = pnand %p333, %p334
      %p336 = pneg %p335
      // Predicated region
      $region49: #{edge_node_mp.1} parent=5 // pred_check
        _
      $region50: #{edge_node_mp.1} parent=5 // pred_check_branch
        %338 = sbr.rel (%p335) target = $region52
      $region51: #{edge_node_mp.1} parent=5 // pred_region
        %s339 = ssub.s32 %s16, 1
        %s340 = smul.u32 %s25, 2
        %s341 = sadd.s32 %s340, %s26
        %s342 = smul.u32 4, %s341
        %p343 = scmp.lt.s32.totalorder %s342, 15
        %s344 = scalar_select %p343, %s342, 15
        %s345 = smul.addr %s344, 2
        %s346 = scalar_lea.vmem %s0, %s345
        %p347 = pneg %p58
        %p348 = pneg %p55
        %s349 = smul.u32 %s25, 2
        %s350 = sadd.s32 %s349, %s26
        %s351 = smul.u32 4, %s350
        %p352 = scmp.lt.s32.totalorder %s351, 15
        %s353 = scalar_select %p352, %s351, 15
        %s354 = smul.addr %s353, 8
        %s355 = scalar_lea.vmem %s1, %s354
        %p356 = pneg %p88
        %p357 = pneg %p85
        %p358 = pneg %p109
        %p359 = pneg %p106
        %p360 = pneg %p130
        %p361 = pneg %p127
        %p362 = pneg %p151
        %p363 = pneg %p148
        %p364 = pneg %p172
        %p365 = pneg %p169
        %p366 = pneg %p193
        %p367 = pneg %p190
        %p368 = pneg %p214
        %p369 = pneg %p211
        %p370 = pneg %p240
        %p371 = pneg %p237
        %p372 = scmp.lt.s32.totalorder %s25, 1
        %s373 = scalar_select %p372, %s25, 1
        %s374 = smul.addr %s373, 3
        %s375 = smul.addr %s374, 8
        %s376 = scalar_lea.vmem %s8, %s375
        %p377 = pneg %p270
        %p378 = pneg %p267
        %s379 = sand.u32 %s257, 1
        %s380 = sand.u32 %s257, 1
        %s381 = smul.addr %s380, 64
        %s382 = scalar_lea.vmem [#allocation3], %s381
        %s383 = smul.u32 %s25, 2
        %s384 = sadd.s32 %s383, %s26
        %s385 = smul.u32 4, %s384
        %p386 = scmp.lt.s32.totalorder %s385, 15
        %s387 = scalar_select %p386, %s385, 15
        %s388 = smul.addr %s387, 2
        %s389 = scalar_lea.vmem %s0, %s388
        %s390 = smul.u32 %s25, 2
        %s391 = sadd.s32 %s390, %s26
        %s392 = smul.u32 4, %s391
        %s393 = smul.u32 %s25, 2
        %s394 = sadd.s32 %s393, %s26
        %s395 = smul.u32 4, %s394
        %p396 = scmp.lt.s32.totalorder %s395, 15
        %s397 = scalar_select %p396, %s395, 15
        %s398 = smul.addr %s397, 8
        %s399 = scalar_lea.vmem %s1, %s398
        %s400 = smul.u32 %s25, 2
        %s401 = sadd.s32 %s400, %s26
        %s402 = smul.u32 4, %s401
        %p403 = scmp.lt.s32.totalorder %s25, 1
        %s404 = scalar_select %p403, %s25, 1
        %s405 = smul.addr %s404, 3
        %s406 = smul.addr %s405, 8
        %s407 = scalar_lea.vmem %s8, %s406
        %s408 = smul.u32 %s25, 2
        %s409 = sadd.s32 %s408, %s26
        %s410 = smul.u32 4, %s409
        %p412 = scmp.eq.s32.totalorder %s26, 0
        // Predicated region
        $region53: #{edge_node_mp.1} parent=51 // pred_check
          %p413 = pneg %p412
        $region54: #{edge_node_mp.1} parent=51 // pred_check_branch
          %415 = sbr.rel (%p413) target = $region56
        $region55: #{edge_node_mp.1} parent=51 // pred_region
          %vm416 = vcmask 523264
          %417 = vst.msk [vmem:[#allocation2] sm:$0xff] %vm416, 0.0
          %418 = vst.msk [vmem:[#allocation2 + $0x8] sm:$0xff] %vm416, 0.0
          %vm419 = vcmask 516096
          %420 = vst.msk [vmem:[#allocation2 + $0x10] sm:$0x1] %vm419, 0.0
        $region56: #{edge_node_mp.1} parent=51 // pred_fallthru
          _
        %v421 = vld [vmem:[%s389] sm:$0xff]
        %v422 = vlaneseq
        %v423 = vshrl.u32 %v422, 7
        %v424 = vadd.s32 %v423, 8
        %v425 = vadd.s32 %v423, 16
        %v426 = vadd.s32 %v423, 24
        %v427 = vadd.s32 %v423, 32
        %v428 = vadd.s32 %v423, 40
        %v429 = vadd.s32 %v423, 48
        %v430 = vadd.s32 %v423, 56
        %v431 = vlaneseq
        %v432 = vshrl.u32 %v431, 7
        %v433 = vsub.s32 0, %v432
        %v434 = vrot.slane %v421, %v433
        %v435 = vlaneseq
        %v436 = vshrl.u32 %v435, 7
        %v437 = vsub.s32 2, %v436
        %v438 = vrot.slane %v421, %v437
        %v439 = vlaneseq
        %v440 = vshrl.u32 %v439, 7
        %v441 = vsub.s32 4, %v440
        %v442 = vrot.slane %v421, %v441
        %v443 = vlaneseq
        %v444 = vshrl.u32 %v443, 7
        %v445 = vsub.s32 6, %v444
        %v446 = vrot.slane %v421, %v445
        %v447 = vlaneseq
        %v448 = vshrl.u32 %v447, 7
        %v449 = vsub.s32 0, %v448
        %v450 = vrot.slane %v434, %v449
        %v451 = vlaneseq
        %v452 = vshrl.u32 %v451, 7
        %v453 = vsub.s32 0, %v452
        %v454 = vrot.slane %v438, %v453
        %v455 = vlaneseq
        %v456 = vshrl.u32 %v455, 7
        %v457 = vsub.s32 0, %v456
        %v458 = vrot.slane %v442, %v457
        %v459 = vlaneseq
        %v460 = vshrl.u32 %v459, 7
        %v461 = vsub.s32 0, %v460
        %v462 = vrot.slane %v446, %v461
        %vm463 = vcmp.eq.s32.totalorder %v423, %v450
        %vm464 = vcmp.eq.s32.totalorder %v423, %v454
        %vm465 = vcmp.eq.s32.totalorder %v423, %v458
        %vm466 = vcmp.eq.s32.totalorder %v423, %v462
        %vm467 = vcmp.eq.s32.totalorder %v424, %v450
        %vm468 = vcmp.eq.s32.totalorder %v424, %v454
        %vm469 = vcmp.eq.s32.totalorder %v424, %v458
        %vm470 = vcmp.eq.s32.totalorder %v424, %v462
        %vm471 = vcmp.eq.s32.totalorder %v425, %v450
        %vm472 = vcmp.eq.s32.totalorder %v425, %v454
        %vm473 = vcmp.eq.s32.totalorder %v425, %v458
        %vm474 = vcmp.eq.s32.totalorder %v425, %v462
        %vm475 = vcmp.eq.s32.totalorder %v426, %v450
        %vm476 = vcmp.eq.s32.totalorder %v426, %v454
        %vm477 = vcmp.eq.s32.totalorder %v426, %v458
        %vm478 = vcmp.eq.s32.totalorder %v426, %v462
        %vm479 = vcmp.eq.s32.totalorder %v427, %v450
        %vm480 = vcmp.eq.s32.totalorder %v427, %v454
        %vm481 = vcmp.eq.s32.totalorder %v427, %v458
        %vm482 = vcmp.eq.s32.totalorder %v427, %v462
        %vm483 = vcmp.eq.s32.totalorder %v428, %v450
        %vm484 = vcmp.eq.s32.totalorder %v428, %v454
        %vm485 = vcmp.eq.s32.totalorder %v428, %v458
        %vm486 = vcmp.eq.s32.totalorder %v428, %v462
        %vm487 = vcmp.eq.s32.totalorder %v429, %v450
        %vm488 = vcmp.eq.s32.totalorder %v429, %v454
        %vm489 = vcmp.eq.s32.totalorder %v429, %v458
        %vm490 = vcmp.eq.s32.totalorder %v429, %v462
        %vm491 = vcmp.eq.s32.totalorder %v430, %v450
        %vm492 = vcmp.eq.s32.totalorder %v430, %v454
        %vm493 = vcmp.eq.s32.totalorder %v430, %v458
        %vm494 = vcmp.eq.s32.totalorder %v430, %v462
        %v495 = vsel %vm463, 1, 0
        %v496 = vsel %vm464, 1, 0
        %v497 = vsel %vm465, 1, 0
        %v498 = vsel %vm466, 1, 0
        %v499 = vsel %vm467, 1, 0
        %v500 = vsel %vm468, 1, 0
        %v501 = vsel %vm469, 1, 0
        %v502 = vsel %vm470, 1, 0
        %v503 = vsel %vm471, 1, 0
        %v504 = vsel %vm472, 1, 0
        %v505 = vsel %vm473, 1, 0
        %v506 = vsel %vm474, 1, 0
        %v507 = vsel %vm475, 1, 0
        %v508 = vsel %vm476, 1, 0
        %v509 = vsel %vm477, 1, 0
        %v510 = vsel %vm478, 1, 0
        %v511 = vsel %vm479, 1, 0
        %v512 = vsel %vm480, 1, 0
        %v513 = vsel %vm481, 1, 0
        %v514 = vsel %vm482, 1, 0
        %v515 = vsel %vm483, 1, 0
        %v516 = vsel %vm484, 1, 0
        %v517 = vsel %vm485, 1, 0
        %v518 = vsel %vm486, 1, 0
        %v519 = vsel %vm487, 1, 0
        %v520 = vsel %vm488, 1, 0
        %v521 = vsel %vm489, 1, 0
        %v522 = vsel %vm490, 1, 0
        %v523 = vsel %vm491, 1, 0
        %v524 = vsel %vm492, 1, 0
        %v525 = vsel %vm493, 1, 0
        %v526 = vsel %vm494, 1, 0
        %v527 = vcvt.s32.f32 %v495
        %v528 = vcvt.s32.f32 %v496
        %v529 = vcvt.s32.f32 %v497
        %v530 = vcvt.s32.f32 %v498
        %v531 = vcvt.s32.f32 %v499
        %v532 = vcvt.s32.f32 %v500
        %v533 = vcvt.s32.f32 %v501
        %v534 = vcvt.s32.f32 %v502
        %v535 = vcvt.s32.f32 %v503
        %v536 = vcvt.s32.f32 %v504
        %v537 = vcvt.s32.f32 %v505
        %v538 = vcvt.s32.f32 %v506
        %v539 = vcvt.s32.f32 %v507
        %v540 = vcvt.s32.f32 %v508
        %v541 = vcvt.s32.f32 %v509
        %v542 = vcvt.s32.f32 %v510
        %v543 = vcvt.s32.f32 %v511
        %v544 = vcvt.s32.f32 %v512
        %v545 = vcvt.s32.f32 %v513
        %v546 = vcvt.s32.f32 %v514
        %v547 = vcvt.s32.f32 %v515
        %v548 = vcvt.s32.f32 %v516
        %v549 = vcvt.s32.f32 %v517
        %v550 = vcvt.s32.f32 %v518
        %v551 = vcvt.s32.f32 %v519
        %v552 = vcvt.s32.f32 %v520
        %v553 = vcvt.s32.f32 %v521
        %v554 = vcvt.s32.f32 %v522
        %v555 = vcvt.s32.f32 %v523
        %v556 = vcvt.s32.f32 %v524
        %v557 = vcvt.s32.f32 %v525
        %v558 = vcvt.s32.f32 %v526
        %v559 = vpack.c.bf16 %v531, %v527
        %v560 = vpack.c.bf16 %v532, %v528
        %v561 = vpack.c.bf16 %v533, %v529
        %v562 = vpack.c.bf16 %v534, %v530
        %v563 = vpack.c.bf16 %v539, %v535
        %v564 = vpack.c.bf16 %v540, %v536
        %v565 = vpack.c.bf16 %v541, %v537
        %v566 = vpack.c.bf16 %v542, %v538
        %v567 = vpack.c.bf16 %v547, %v543
        %v568 = vpack.c.bf16 %v548, %v544
        %v569 = vpack.c.bf16 %v549, %v545
        %v570 = vpack.c.bf16 %v550, %v546
        %v571 = vpack.c.bf16 %v555, %v551
        %v572 = vpack.c.bf16 %v556, %v552
        %v573 = vpack.c.bf16 %v557, %v553
        %v574 = vpack.c.bf16 %v558, %v554
        %v575 = vlaneseq
        %v576 = vshrl.u32 %v575, 7
        %v577 = vsub.s32 1, %v576
        %v578 = vrot.slane %v421, %v577
        %v579 = vlaneseq
        %v580 = vshrl.u32 %v579, 7
        %v581 = vsub.s32 3, %v580
        %v582 = vrot.slane %v421, %v581
        %v583 = vlaneseq
        %v584 = vshrl.u32 %v583, 7
        %v585 = vsub.s32 5, %v584
        %v586 = vrot.slane %v421, %v585
        %v587 = vlaneseq
        %v588 = vshrl.u32 %v587, 7
        %v589 = vsub.s32 7, %v588
        %v590 = vrot.slane %v421, %v589
        %v591 = vlaneseq
        %v592 = vshrl.u32 %v591, 7
        %v593 = vsub.s32 1, %v592
        %v594 = vrot.slane %v578, %v593
        %v595 = vlaneseq
        %v596 = vshrl.u32 %v595, 7
        %v597 = vsub.s32 1, %v596
        %v598 = vrot.slane %v582, %v597
        %v599 = vlaneseq
        %v600 = vshrl.u32 %v599, 7
        %v601 = vsub.s32 1, %v600
        %v602 = vrot.slane %v586, %v601
        %v603 = vlaneseq
        %v604 = vshrl.u32 %v603, 7
        %v605 = vsub.s32 1, %v604
        %v606 = vrot.slane %v590, %v605
        %vm607 = vcmp.eq.s32.totalorder %v423, %v594
        %vm608 = vcmp.eq.s32.totalorder %v423, %v598
        %vm609 = vcmp.eq.s32.totalorder %v423, %v602
        %vm610 = vcmp.eq.s32.totalorder %v423, %v606
        %vm611 = vcmp.eq.s32.totalorder %v424, %v594
        %vm612 = vcmp.eq.s32.totalorder %v424, %v598
        %vm613 = vcmp.eq.s32.totalorder %v424, %v602
        %vm614 = vcmp.eq.s32.totalorder %v424, %v606
        %vm615 = vcmp.eq.s32.totalorder %v425, %v594
        %vm616 = vcmp.eq.s32.totalorder %v425, %v598
        %vm617 = vcmp.eq.s32.totalorder %v425, %v602
        %vm618 = vcmp.eq.s32.totalorder %v425, %v606
        %vm619 = vcmp.eq.s32.totalorder %v426, %v594
        %vm620 = vcmp.eq.s32.totalorder %v426, %v598
        %vm621 = vcmp.eq.s32.totalorder %v426, %v602
        %vm622 = vcmp.eq.s32.totalorder %v426, %v606
        %vm623 = vcmp.eq.s32.totalorder %v427, %v594
        %vm624 = vcmp.eq.s32.totalorder %v427, %v598
        %vm625 = vcmp.eq.s32.totalorder %v427, %v602
        %vm626 = vcmp.eq.s32.totalorder %v427, %v606
        %vm627 = vcmp.eq.s32.totalorder %v428, %v594
        %vm628 = vcmp.eq.s32.totalorder %v428, %v598
        %vm629 = vcmp.eq.s32.totalorder %v428, %v602
        %vm630 = vcmp.eq.s32.totalorder %v428, %v606
        %vm631 = vcmp.eq.s32.totalorder %v429, %v594
        %vm632 = vcmp.eq.s32.totalorder %v429, %v598
        %vm633 = vcmp.eq.s32.totalorder %v429, %v602
        %vm634 = vcmp.eq.s32.totalorder %v429, %v606
        %vm635 = vcmp.eq.s32.totalorder %v430, %v594
        %vm636 = vcmp.eq.s32.totalorder %v430, %v598
        %vm637 = vcmp.eq.s32.totalorder %v430, %v602
        %vm638 = vcmp.eq.s32.totalorder %v430, %v606
        %v639 = vsel %vm607, 1, 0
        %v640 = vsel %vm608, 1, 0
        %v641 = vsel %vm609, 1, 0
        %v642 = vsel %vm610, 1, 0
        %v643 = vsel %vm611, 1, 0
        %v644 = vsel %vm612, 1, 0
        %v645 = vsel %vm613, 1, 0
        %v646 = vsel %vm614, 1, 0
        %v647 = vsel %vm615, 1, 0
        %v648 = vsel %vm616, 1, 0
        %v649 = vsel %vm617, 1, 0
        %v650 = vsel %vm618, 1, 0
        %v651 = vsel %vm619, 1, 0
        %v652 = vsel %vm620, 1, 0
        %v653 = vsel %vm621, 1, 0
        %v654 = vsel %vm622, 1, 0
        %v655 = vsel %vm623, 1, 0
        %v656 = vsel %vm624, 1, 0
        %v657 = vsel %vm625, 1, 0
        %v658 = vsel %vm626, 1, 0
        %v659 = vsel %vm627, 1, 0
        %v660 = vsel %vm628, 1, 0
        %v661 = vsel %vm629, 1, 0
        %v662 = vsel %vm630, 1, 0
        %v663 = vsel %vm631, 1, 0
        %v664 = vsel %vm632, 1, 0
        %v665 = vsel %vm633, 1, 0
        %v666 = vsel %vm634, 1, 0
        %v667 = vsel %vm635, 1, 0
        %v668 = vsel %vm636, 1, 0
        %v669 = vsel %vm637, 1, 0
        %v670 = vsel %vm638, 1, 0
        %v671 = vcvt.s32.f32 %v639
        %v672 = vcvt.s32.f32 %v640
        %v673 = vcvt.s32.f32 %v641
        %v674 = vcvt.s32.f32 %v642
        %v675 = vcvt.s32.f32 %v643
        %v676 = vcvt.s32.f32 %v644
        %v677 = vcvt.s32.f32 %v645
        %v678 = vcvt.s32.f32 %v646
        %v679 = vcvt.s32.f32 %v647
        %v680 = vcvt.s32.f32 %v648
        %v681 = vcvt.s32.f32 %v649
        %v682 = vcvt.s32.f32 %v650
        %v683 = vcvt.s32.f32 %v651
        %v684 = vcvt.s32.f32 %v652
        %v685 = vcvt.s32.f32 %v653
        %v686 = vcvt.s32.f32 %v654
        %v687 = vcvt.s32.f32 %v655
        %v688 = vcvt.s32.f32 %v656
        %v689 = vcvt.s32.f32 %v657
        %v690 = vcvt.s32.f32 %v658
        %v691 = vcvt.s32.f32 %v659
        %v692 = vcvt.s32.f32 %v660
        %v693 = vcvt.s32.f32 %v661
        %v694 = vcvt.s32.f32 %v662
        %v695 = vcvt.s32.f32 %v663
        %v696 = vcvt.s32.f32 %v664
        %v697 = vcvt.s32.f32 %v665
        %v698 = vcvt.s32.f32 %v666
        %v699 = vcvt.s32.f32 %v667
        %v700 = vcvt.s32.f32 %v668
        %v701 = vcvt.s32.f32 %v669
        %v702 = vcvt.s32.f32 %v670
        %v703 = vld [vmem:[%s2] sm:$0xf]
        %v704 = vld [vmem:[%s2 + $0x4] sm:$0xf]
        %v705 = vld [vmem:[%s2 + $0x8] sm:$0xf]
        %v706 = vld [vmem:[%s2 + $0xc] sm:$0xf]
        %v707 = vld [vmem:[%s3] sm:$0xf]
        %v708 = vld [vmem:[%s3 + $0x4] sm:$0xf]
        %v709 = vld [vmem:[%s3 + $0x8] sm:$0xf]
        %v710 = vld [vmem:[%s3 + $0xc] sm:$0xf]
        %v715 = vunpack.c.l.b16 %v707
        %v716 = vunpack.c.l.b16 %v708
        %v717 = vunpack.c.l.b16 %v709
        %v718 = vunpack.c.l.b16 %v710
        %v719 = vpack.c.b16 %v716, %v715
        %v720 = vpack.c.b16 %v718, %v717
        %vm721 = vcmask 523264
        %v723 = vsel %vm721, %v719, 0
        %v726 = vsel %vm721, %v720, 0
        %728 = vmatprep.subr.bf16.mxu0 %v560
        %729 = vmatpush1.bf16.msra.mxu0 %v559
        %730 = vmatprep.subr.bf16.mxu0 %v564
        %731 = vmatpush1.bf16.msra.mxu0 %v563
        %732 = vmatprep.subr.bf16.mxu0 %v568
        %733 = vmatpush1.bf16.msra.mxu0 %v567
        %734 = vmatprep.subr.bf16.mxu0 %v572
        %735 = vmatpush1.bf16.msra.mxu0 %v571
        %736 = vmatprep.subr.bf16.mxu0 0
        %737 = vmatpush1.bf16.msra.mxu0 0
        %738 = vmatprep.subr.bf16.mxu0 0
        %739 = vmatpush1.bf16.msra.mxu0 0
        %740 = vmatprep.subr.bf16.mxu0 0
        %741 = vmatpush1.bf16.msra.mxu0 0
        %742 = vmatprep.subr.bf16.mxu0 0
        %743 = vmatpush1.bf16.msra.mxu0 0
        %744 = vmatprep.subr.bf16.mxu0 0
        %745 = vmatpush1.bf16.msra.mxu0 0
        %746 = vmatprep.subr.bf16.mxu0 0
        %747 = vmatpush1.bf16.msra.mxu0 0
        %748 = vmatprep.subr.bf16.mxu0 0
        %749 = vmatpush1.bf16.msra.mxu0 0
        %750 = vmatprep.subr.bf16.mxu0 0
        %751 = vmatpush1.bf16.msra.mxu0 0
        %752 = vmatprep.subr.bf16.mxu0 0
        %753 = vmatpush1.bf16.msra.mxu0 0
        %754 = vmatprep.subr.bf16.mxu0 0
        %755 = vmatpush1.bf16.msra.mxu0 0
        %756 = vmatprep.subr.bf16.mxu0 0
        %757 = vmatpush1.bf16.msra.mxu0 0
        %758 = vmatprep.subr.bf16.mxu0 0
        %759 = vmatpush1.bf16.msra.mxu0 0
        %760 = vmatprep.mubr.bf16.mxu0 0
        %761 = vmatmul.mubr.bf16.gmra.mrb[0].mxu0 %v723
        %v762 = vpop.f32.mrb[0].mxu0
        %v763 = vadd.f32 0.0, %v762
        %v764 = vpop.f32.mrb[0].mxu0
        %v765 = vadd.f32 0.0, %v764
        %v766 = vpop.f32.mrb[0].mxu0
        %v767 = vadd.f32 0.0, %v766
        %v768 = vpop.f32.mrb[0].mxu0
        %v769 = vadd.f32 0.0, %v768
        %770 = vmatprep.mubr.bf16.mxu0 0
        %771 = vmatmul.mubr.bf16.gmra.mrb[0].mxu0 %v726
        %v772 = vpop.f32.mrb[0].mxu0
        %v773 = vadd.f32 0.0, %v772
        %v774 = vpop.f32.mrb[0].mxu0
        %v775 = vadd.f32 0.0, %v774
        %v776 = vpop.f32.mrb[0].mxu0
        %v777 = vadd.f32 0.0, %v776
        %v778 = vpop.f32.mrb[0].mxu0
        %v779 = vadd.f32 0.0, %v778
        %780 = vdwg.mxu0
        %781 = vmatprep.subr.bf16.mxu0 %v562
        %782 = vmatpush1.bf16.msra.mxu0 %v561
        %783 = vmatprep.subr.bf16.mxu0 %v566
        %784 = vmatpush1.bf16.msra.mxu0 %v565
        %785 = vmatprep.subr.bf16.mxu0 %v570
        %786 = vmatpush1.bf16.msra.mxu0 %v569
        %787 = vmatprep.subr.bf16.mxu0 %v574
        %788 = vmatpush1.bf16.msra.mxu0 %v573
        %789 = vmatprep.subr.bf16.mxu0 0
        %790 = vmatpush1.bf16.msra.mxu0 0
        %791 = vmatprep.subr.bf16.mxu0 0
        %792 = vmatpush1.bf16.msra.mxu0 0
        %793 = vmatprep.subr.bf16.mxu0 0
        %794 = vmatpush1.bf16.msra.mxu0 0
        %795 = vmatprep.subr.bf16.mxu0 0
        %796 = vmatpush1.bf16.msra.mxu0 0
        %797 = vmatprep.subr.bf16.mxu0 0
        %798 = vmatpush1.bf16.msra.mxu0 0
        %799 = vmatprep.subr.bf16.mxu0 0
        %800 = vmatpush1.bf16.msra.mxu0 0
        %801 = vmatprep.subr.bf16.mxu0 0
        %802 = vmatpush1.bf16.msra.mxu0 0
        %803 = vmatprep.subr.bf16.mxu0 0
        %804 = vmatpush1.bf16.msra.mxu0 0
        %805 = vmatprep.subr.bf16.mxu0 0
        %806 = vmatpush1.bf16.msra.mxu0 0
        %807 = vmatprep.subr.bf16.mxu0 0
        %808 = vmatpush1.bf16.msra.mxu0 0
        %809 = vmatprep.subr.bf16.mxu0 0
        %810 = vmatpush1.bf16.msra.mxu0 0
        %811 = vmatprep.subr.bf16.mxu0 0
        %812 = vmatpush1.bf16.msra.mxu0 0
        %813 = vmatprep.mubr.bf16.mxu0 0
        %814 = vmatmul.mubr.bf16.gmra.mrb[0].mxu0 %v723
        %v815 = vpop.f32.mrb[0].mxu0
        %v816 = vadd.f32 0.0, %v815
        %v817 = vpop.f32.mrb[0].mxu0
        %v818 = vadd.f32 0.0, %v817
        %v819 = vpop.f32.mrb[0].mxu0
        %v820 = vadd.f32 0.0, %v819
        %v821 = vpop.f32.mrb[0].mxu0
        %v822 = vadd.f32 0.0, %v821
        %823 = vmatprep.mubr.bf16.mxu0 0
        %824 = vmatmul.mubr.bf16.gmra.mrb[0].mxu0 %v726
        %v825 = vpop.f32.mrb[0].mxu0
        %v826 = vadd.f32 0.0, %v825
        %v827 = vpop.f32.mrb[0].mxu0
        %v828 = vadd.f32 0.0, %v827
        %v829 = vpop.f32.mrb[0].mxu0
        %v830 = vadd.f32 0.0, %v829
        %v831 = vpop.f32.mrb[0].mxu0
        %v832 = vadd.f32 0.0, %v831
        %833 = vdwg.mxu0
        %v838 = vunpack.c.l.b16 %v703
        %v839 = vunpack.c.l.b16 %v704
        %v840 = vunpack.c.l.b16 %v705
        %v841 = vunpack.c.l.b16 %v706
        %v842 = vpack.c.b16 %v839, %v838
        %v843 = vpack.c.b16 %v841, %v840
        %v845 = vsel %vm721, %v842, 0
        %v848 = vsel %vm721, %v843, 0
        %850 = vmatprep.subr.bf16.mxu0 %v560
        %851 = vmatpush1.bf16.msra.mxu0 %v559
        %852 = vmatprep.subr.bf16.mxu0 %v564
        %853 = vmatpush1.bf16.msra.mxu0 %v563
        %854 = vmatprep.subr.bf16.mxu0 %v568
        %855 = vmatpush1.bf16.msra.mxu0 %v567
        %856 = vmatprep.subr.bf16.mxu0 %v572
        %857 = vmatpush1.bf16.msra.mxu0 %v571
        %858 = vmatprep.subr.bf16.mxu0 0
        %859 = vmatpush1.bf16.msra.mxu0 0
        %860 = vmatprep.subr.bf16.mxu0 0
        %861 = vmatpush1.bf16.msra.mxu0 0
        %862 = vmatprep.subr.bf16.mxu0 0
        %863 = vmatpush1.bf16.msra.mxu0 0
        %864 = vmatprep.subr.bf16.mxu0 0
        %865 = vmatpush1.bf16.msra.mxu0 0
        %866 = vmatprep.subr.bf16.mxu0 0
        %867 = vmatpush1.bf16.msra.mxu0 0
        %868 = vmatprep.subr.bf16.mxu0 0
        %869 = vmatpush1.bf16.msra.mxu0 0
        %870 = vmatprep.subr.bf16.mxu0 0
        %871 = vmatpush1.bf16.msra.mxu0 0
        %872 = vmatprep.subr.bf16.mxu0 0
        %873 = vmatpush1.bf16.msra.mxu0 0
        %874 = vmatprep.subr.bf16.mxu0 0
        %875 = vmatpush1.bf16.msra.mxu0 0
        %876 = vmatprep.subr.bf16.mxu0 0
        %877 = vmatpush1.bf16.msra.mxu0 0
        %878 = vmatprep.subr.bf16.mxu0 0
        %879 = vmatpush1.bf16.msra.mxu0 0
        %880 = vmatprep.subr.bf16.mxu0 0
        %881 = vmatpush1.bf16.msra.mxu0 0
        %882 = vmatprep.mubr.bf16.mxu0 0
        %883 = vmatmul.mubr.bf16.gmra.mrb[0].mxu0 %v845
        %v884 = vpop.f32.mrb[0].mxu0
        %v885 = vadd.f32 %v763, %v884
        %v886 = vpop.f32.mrb[0].mxu0
        %v887 = vadd.f32 %v765, %v886
        %v888 = vpop.f32.mrb[0].mxu0
        %v889 = vadd.f32 %v767, %v888
        %v890 = vpop.f32.mrb[0].mxu0
        %v891 = vadd.f32 %v769, %v890
        %892 = vmatprep.mubr.bf16.mxu0 0
        %893 = vmatmul.mubr.bf16.gmra.mrb[0].mxu0 %v848
        %v894 = vpop.f32.mrb[0].mxu0
        %v895 = vadd.f32 %v773, %v894
        %v896 = vpop.f32.mrb[0].mxu0
        %v897 = vadd.f32 %v775, %v896
        %v898 = vpop.f32.mrb[0].mxu0
        %v899 = vadd.f32 %v777, %v898
        %v900 = vpop.f32.mrb[0].mxu0
        %v901 = vadd.f32 %v779, %v900
        %902 = vdwg.mxu0
        %903 = vmatprep.subr.bf16.mxu0 %v562
        %904 = vmatpush1.bf16.msra.mxu0 %v561
        %905 = vmatprep.subr.bf16.mxu0 %v566
        %906 = vmatpush1.bf16.msra.mxu0 %v565
        %907 = vmatprep.subr.bf16.mxu0 %v570
        %908 = vmatpush1.bf16.msra.mxu0 %v569
        %909 = vmatprep.subr.bf16.mxu0 %v574
        %910 = vmatpush1.bf16.msra.mxu0 %v573
        %911 = vmatprep.subr.bf16.mxu0 0
        %912 = vmatpush1.bf16.msra.mxu0 0
        %913 = vmatprep.subr.bf16.mxu0 0
        %914 = vmatpush1.bf16.msra.mxu0 0
        %915 = vmatprep.subr.bf16.mxu0 0
        %916 = vmatpush1.bf16.msra.mxu0 0
        %917 = vmatprep.subr.bf16.mxu0 0
        %918 = vmatpush1.bf16.msra.mxu0 0
        %919 = vmatprep.subr.bf16.mxu0 0
        %920 = vmatpush1.bf16.msra.mxu0 0
        %921 = vmatprep.subr.bf16.mxu0 0
        %922 = vmatpush1.bf16.msra.mxu0 0
        %923 = vmatprep.subr.bf16.mxu0 0
        %924 = vmatpush1.bf16.msra.mxu0 0
        %925 = vmatprep.subr.bf16.mxu0 0
        %926 = vmatpush1.bf16.msra.mxu0 0
        %927 = vmatprep.subr.bf16.mxu0 0
        %928 = vmatpush1.bf16.msra.mxu0 0
        %929 = vmatprep.subr.bf16.mxu0 0
        %930 = vmatpush1.bf16.msra.mxu0 0
        %931 = vmatprep.subr.bf16.mxu0 0
        %932 = vmatpush1.bf16.msra.mxu0 0
        %933 = vmatprep.subr.bf16.mxu0 0
        %934 = vmatpush1.bf16.msra.mxu0 0
        %935 = vmatprep.mubr.bf16.mxu0 0
        %936 = vmatmul.mubr.bf16.gmra.mrb[0].mxu0 %v845
        %v937 = vpop.f32.mrb[0].mxu0
        %v938 = vadd.f32 %v816, %v937
        %v939 = vpop.f32.mrb[0].mxu0
        %v940 = vadd.f32 %v818, %v939
        %v941 = vpop.f32.mrb[0].mxu0
        %v942 = vadd.f32 %v820, %v941
        %v943 = vpop.f32.mrb[0].mxu0
        %v944 = vadd.f32 %v822, %v943
        %945 = vmatprep.mubr.bf16.mxu0 0
        %946 = vmatmul.mubr.bf16.gmra.mrb[0].mxu0 %v848
        %v947 = vpop.f32.mrb[0].mxu0
        %v948 = vadd.f32 %v826, %v947
        %v949 = vpop.f32.mrb[0].mxu0
        %v950 = vadd.f32 %v828, %v949
        %v951 = vpop.f32.mrb[0].mxu0
        %v952 = vadd.f32 %v830, %v951
        %v953 = vpop.f32.mrb[0].mxu0
        %v954 = vadd.f32 %v832, %v953
        %955 = vdwg.mxu0
        %v956 = vld [vmem:[%s4] sm:$0xff]
        %v957 = vld [vmem:[%s4 + $0x8] sm:$0xff]
        %v958 = vld [vmem:[%s4 + $0x10] sm:$0xff]
        %v959 = vld [vmem:[%s4 + $0x18] sm:$0xff]
        %v960 = vld [vmem:[%s399] sm:$0xff]
        %v961 = vld [vmem:[%s399 + $0x8] sm:$0xff]
        %v962 = vld [vmem:[%s399 + $0x10] sm:$0xff]
        %v963 = vld [vmem:[%s399 + $0x18] sm:$0xff]
        %vm964 = vcmask 64512
        %v966 = vsel %vm964, %v956, 0
        %v969 = vsel %vm964, %v957, 0
        %v972 = vsel %vm964, %v958, 0
        %v975 = vsel %vm964, %v959, 0
        %977 = vmatprep.subr.mxu0 %v961
        %978 = vmatpush1.msra.mxu0 %v960
        %979 = vmatprep.subr.mxu0 0.0
        %980 = vmatpush1.msra.mxu0 0.0
        %981 = vmatprep.subr.mxu0 0.0
        %982 = vmatpush1.msra.mxu0 0.0
        %983 = vmatprep.subr.mxu0 0.0
        %984 = vmatpush1.msra.mxu0 0.0
        %985 = vmatprep.subr.mxu0 0.0
        %986 = vmatpush1.msra.mxu0 0.0
        %987 = vmatprep.subr.mxu0 0.0
        %988 = vmatpush1.msra.mxu0 0.0
        %989 = vmatprep.subr.mxu0 0.0
        %990 = vmatpush1.msra.mxu0 0.0
        %991 = vmatprep.subr.mxu0 0.0
        %992 = vmatpush1.msra.mxu0 0.0
        %993 = vmatprep.subr.mxu0 0.0
        %994 = vmatpush1.msra.mxu0 0.0
        %995 = vmatprep.subr.mxu0 0.0
        %996 = vmatpush1.msra.mxu0 0.0
        %997 = vmatprep.subr.mxu0 0.0
        %998 = vmatpush1.msra.mxu0 0.0
        %999 = vmatprep.subr.mxu0 0.0
        %1000 = vmatpush1.msra.mxu0 0.0
        %1001 = vmatprep.subr.mxu0 0.0
        %1002 = vmatpush1.msra.mxu0 0.0
        %1003 = vmatprep.subr.mxu0 0.0
        %1004 = vmatpush1.msra.mxu0 0.0
        %1005 = vmatprep.subr.mxu0 0.0
        %1006 = vmatpush1.msra.mxu0 0.0
        %1007 = vmatprep.subr.mxu0 0.0
        %1008 = vmatpush1.msra.mxu0 0.0
        %1009 = vmatprep.subr.mxu0 0.0
        %1010 = vmatpush1.msra.mxu0 0.0
        %1011 = vmatprep.subr.mxu0 0.0
        %1012 = vmatpush1.msra.mxu0 0.0
        %1013 = vmatprep.subr.mxu0 0.0
        %1014 = vmatpush1.msra.mxu0 0.0
        %1015 = vmatprep.subr.mxu0 0.0
        %1016 = vmatpush1.msra.mxu0 0.0
        %1017 = vmatprep.subr.mxu0 0.0
        %1018 = vmatpush1.msra.mxu0 0.0
        %1019 = vmatprep.subr.mxu0 0.0
        %1020 = vmatpush1.msra.mxu0 0.0
        %1021 = vmatprep.subr.mxu0 0.0
        %1022 = vmatpush1.msra.mxu0 0.0
        %1023 = vmatprep.subr.mxu0 0.0
        %1024 = vmatpush1.msra.mxu0 0.0
        %1025 = vmatprep.subr.mxu0 0.0
        %1026 = vmatpush1.msra.mxu0 0.0
        %1027 = vmatprep.subr.mxu0 0.0
        %1028 = vmatpush1.msra.mxu0 0.0
        %1029 = vmatprep.subr.mxu0 0.0
        %1030 = vmatpush1.msra.mxu0 0.0
        %1031 = vmatprep.subr.mxu0 0.0
        %1032 = vmatpush1.msra.mxu0 0.0
        %1033 = vmatprep.subr.mxu0 0.0
        %1034 = vmatpush1.msra.mxu0 0.0
        %1035 = vmatprep.subr.mxu0 0.0
        %1036 = vmatpush1.msra.mxu0 0.0
        %1037 = vmatprep.subr.mxu0 0.0
        %1038 = vmatpush1.msra.mxu0 0.0
        %1039 = vmatprep.subr.mxu0 0.0
        %1040 = vmatpush1.msra.mxu0 0.0
        %1041 = vmatprep.mubr.f32.mxu0 0.0
        %1042 = vmatmul.mubr.f32.gmra.mrb[0].mxu0 %v966
        %v1043 = vpop.f32.mrb[0].mxu0
        %v1044 = vadd.f32 0.0, %v1043
        %v1045 = vpop.f32.mrb[0].mxu0
        %v1046 = vadd.f32 0.0, %v1045
        %1047 = vmatprep.mubr.f32.mxu0 0.0
        %1048 = vmatmul.mubr.f32.gmra.mrb[0].mxu0 %v969
        %v1049 = vpop.f32.mrb[0].mxu0
        %v1050 = vadd.f32 0.0, %v1049
        %v1051 = vpop.f32.mrb[0].mxu0
        %v1052 = vadd.f32 0.0, %v1051
        %1053 = vmatprep.mubr.f32.mxu0 0.0
        %1054 = vmatmul.mubr.f32.gmra.mrb[0].mxu0 %v972
        %v1055 = vpop.f32.mrb[0].mxu0
        %v1056 = vadd.f32 0.0, %v1055
        %v1057 = vpop.f32.mrb[0].mxu0
        %v1058 = vadd.f32 0.0, %v1057
        %1059 = vmatprep.mubr.f32.mxu0 0.0
        %1060 = vmatmul.mubr.f32.gmra.mrb[0].mxu0 %v975
        %v1061 = vpop.f32.mrb[0].mxu0
        %v1062 = vadd.f32 0.0, %v1061
        %v1063 = vpop.f32.mrb[0].mxu0
        %v1064 = vadd.f32 0.0, %v1063
        %1065 = vdwg.mxu0
        %1066 = vmatprep.subr.mxu0 %v963
        %1067 = vmatpush1.msra.mxu0 %v962
        %1068 = vmatprep.subr.mxu0 0.0
        %1069 = vmatpush1.msra.mxu0 0.0
        %1070 = vmatprep.subr.mxu0 0.0
        %1071 = vmatpush1.msra.mxu0 0.0
        %1072 = vmatprep.subr.mxu0 0.0
        %1073 = vmatpush1.msra.mxu0 0.0
        %1074 = vmatprep.subr.mxu0 0.0
        %1075 = vmatpush1.msra.mxu0 0.0
        %1076 = vmatprep.subr.mxu0 0.0
        %1077 = vmatpush1.msra.mxu0 0.0
        %1078 = vmatprep.subr.mxu0 0.0
        %1079 = vmatpush1.msra.mxu0 0.0
        %1080 = vmatprep.subr.mxu0 0.0
        %1081 = vmatpush1.msra.mxu0 0.0
        %1082 = vmatprep.subr.mxu0 0.0
        %1083 = vmatpush1.msra.mxu0 0.0
        %1084 = vmatprep.subr.mxu0 0.0
        %1085 = vmatpush1.msra.mxu0 0.0
        %1086 = vmatprep.subr.mxu0 0.0
        %1087 = vmatpush1.msra.mxu0 0.0
        %1088 = vmatprep.subr.mxu0 0.0
        %1089 = vmatpush1.msra.mxu0 0.0
        %1090 = vmatprep.subr.mxu0 0.0
        %1091 = vmatpush1.msra.mxu0 0.0
        %1092 = vmatprep.subr.mxu0 0.0
        %1093 = vmatpush1.msra.mxu0 0.0
        %1094 = vmatprep.subr.mxu0 0.0
        %1095 = vmatpush1.msra.mxu0 0.0
        %1096 = vmatprep.subr.mxu0 0.0
        %1097 = vmatpush1.msra.mxu0 0.0
        %1098 = vmatprep.subr.mxu0 0.0
        %1099 = vmatpush1.msra.mxu0 0.0
        %1100 = vmatprep.subr.mxu0 0.0
        %1101 = vmatpush1.msra.mxu0 0.0
        %1102 = vmatprep.subr.mxu0 0.0
        %1103 = vmatpush1.msra.mxu0 0.0
        %1104 = vmatprep.subr.mxu0 0.0
        %1105 = vmatpush1.msra.mxu0 0.0
        %1106 = vmatprep.subr.mxu0 0.0
        %1107 = vmatpush1.msra.mxu0 0.0
        %1108 = vmatprep.subr.mxu0 0.0
        %1109 = vmatpush1.msra.mxu0 0.0
        %1110 = vmatprep.subr.mxu0 0.0
        %1111 = vmatpush1.msra.mxu0 0.0
        %1112 = vmatprep.subr.mxu0 0.0
        %1113 = vmatpush1.msra.mxu0 0.0
        %1114 = vmatprep.subr.mxu0 0.0
        %1115 = vmatpush1.msra.mxu0 0.0
        %1116 = vmatprep.subr.mxu0 0.0
        %1117 = vmatpush1.msra.mxu0 0.0
        %1118 = vmatprep.subr.mxu0 0.0
        %1119 = vmatpush1.msra.mxu0 0.0
        %1120 = vmatprep.subr.mxu0 0.0
        %1121 = vmatpush1.msra.mxu0 0.0
        %1122 = vmatprep.subr.mxu0 0.0
        %1123 = vmatpush1.msra.mxu0 0.0
        %1124 = vmatprep.subr.mxu0 0.0
        %1125 = vmatpush1.msra.mxu0 0.0
        %1126 = vmatprep.subr.mxu0 0.0
        %1127 = vmatpush1.msra.mxu0 0.0
        %1128 = vmatprep.subr.mxu0 0.0
        %1129 = vmatpush1.msra.mxu0 0.0
        %1130 = vmatprep.mubr.f32.mxu0 0.0
        %1131 = vmatmul.mubr.f32.gmra.mrb[0].mxu0 %v966
        %v1132 = vpop.f32.mrb[0].mxu0
        %v1133 = vadd.f32 0.0, %v1132
        %v1134 = vpop.f32.mrb[0].mxu0
        %v1135 = vadd.f32 0.0, %v1134
        %1136 = vmatprep.mubr.f32.mxu0 0.0
        %1137 = vmatmul.mubr.f32.gmra.mrb[0].mxu0 %v969
        %v1138 = vpop.f32.mrb[0].mxu0
        %v1139 = vadd.f32 0.0, %v1138
        %v1140 = vpop.f32.mrb[0].mxu0
        %v1141 = vadd.f32 0.0, %v1140
        %1142 = vmatprep.mubr.f32.mxu0 0.0
        %1143 = vmatmul.mubr.f32.gmra.mrb[0].mxu0 %v972
        %v1144 = vpop.f32.mrb[0].mxu0
        %v1145 = vadd.f32 0.0, %v1144
        %v1146 = vpop.f32.mrb[0].mxu0
        %v1147 = vadd.f32 0.0, %v1146
        %1148 = vmatprep.mubr.f32.mxu0 0.0
        %1149 = vmatmul.mubr.f32.gmra.mrb[0].mxu0 %v975
        %v1150 = vpop.f32.mrb[0].mxu0
        %v1151 = vadd.f32 0.0, %v1150
        %v1152 = vpop.f32.mrb[0].mxu0
        %v1153 = vadd.f32 0.0, %v1152
        %1154 = vdwg.mxu0
        %v1155 = vadd.f32 %v885, %v1044
        %v1156 = vadd.f32 %v887, %v1046
        %v1157 = vadd.f32 %v938, %v1133
        %v1158 = vadd.f32 %v940, %v1135
        %v1159 = vadd.f32 %v889, %v1050
        %v1160 = vadd.f32 %v891, %v1052
        %v1161 = vadd.f32 %v942, %v1139
        %v1162 = vadd.f32 %v944, %v1141
        %v1163 = vadd.f32 %v895, %v1056
        %v1164 = vadd.f32 %v897, %v1058
        %v1165 = vadd.f32 %v948, %v1145
        %v1166 = vadd.f32 %v950, %v1147
        %v1167 = vadd.f32 %v899, %v1062
        %v1168 = vadd.f32 %v901, %v1064
        %v1169 = vadd.f32 %v952, %v1151
        %v1170 = vadd.f32 %v954, %v1153
        %v1171 = vld [vmem:[%s5] sm:$0xff]
        %v1172 = vld [vmem:[%s5 + $0x8] sm:$0xff]
        %v1173 = vld [vmem:[%s5 + $0x10] sm:$0xff]
        %v1174 = vld [vmem:[%s5 + $0x18] sm:$0xff]
        %1176 = vset.pattern.permute.xlu0 0
        %1177 = vperm.xlu0 %1176, %v1171
        %v1178 = vpop.permute.xlu0 %1177
        %1181 = vset.pattern.permute.xlu0 0
        %1182 = vperm.xlu0 %1181, %v1172
        %v1183 = vpop.permute.xlu0 %1182
        %1186 = vset.pattern.permute.xlu0 0
        %1187 = vperm.xlu0 %1186, %v1173
        %v1188 = vpop.permute.xlu0 %1187
        %1191 = vset.pattern.permute.xlu0 0
        %1192 = vperm.xlu0 %1191, %v1174
        %v1193 = vpop.permute.xlu0 %1192
        %v1195 = vadd.f32 %v1155, %v1178
        %v1196 = vadd.f32 %v1156, %v1178
        %v1197 = vadd.f32 %v1157, %v1178
        %v1198 = vadd.f32 %v1158, %v1178
        %v1199 = vadd.f32 %v1159, %v1183
        %v1200 = vadd.f32 %v1160, %v1183
        %v1201 = vadd.f32 %v1161, %v1183
        %v1202 = vadd.f32 %v1162, %v1183
        %v1203 = vadd.f32 %v1163, %v1188
        %v1204 = vadd.f32 %v1164, %v1188
        %v1205 = vadd.f32 %v1165, %v1188
        %v1206 = vadd.f32 %v1166, %v1188
        %v1207 = vadd.f32 %v1167, %v1193
        %v1208 = vadd.f32 %v1168, %v1193
        %v1209 = vadd.f32 %v1169, %v1193
        %v1210 = vadd.f32 %v1170, %v1193
        %v1211 = vmax.f32 %v1195, 0.0
        %v1212 = vmax.f32 %v1196, 0.0
        %v1213 = vmax.f32 %v1197, 0.0
        %v1214 = vmax.f32 %v1198, 0.0
        %v1215 = vmax.f32 %v1199, 0.0
        %v1216 = vmax.f32 %v1200, 0.0
        %v1217 = vmax.f32 %v1201, 0.0
        %v1218 = vmax.f32 %v1202, 0.0
        %v1219 = vmax.f32 %v1203, 0.0
        %v1220 = vmax.f32 %v1204, 0.0
        %v1221 = vmax.f32 %v1205, 0.0
        %v1222 = vmax.f32 %v1206, 0.0
        %v1223 = vmax.f32 %v1207, 0.0
        %v1224 = vmax.f32 %v1208, 0.0
        %v1225 = vmax.f32 %v1209, 0.0
        %v1226 = vmax.f32 %v1210, 0.0
        %v1227 = vld [vmem:[%s6] sm:$0xff]
        %v1228 = vld [vmem:[%s6 + $0x8] sm:$0xff]
        %v1229 = vld [vmem:[%s6 + $0x10] sm:$0x1]
        %v1230 = vld [vmem:[%s7] sm:$0xff]
        %v1231 = vld [vmem:[%s7 + $0x8] sm:$0xff]
        %v1232 = vld [vmem:[%s7 + $0x10] sm:$0x1]
        %1234 = vset.pattern.permute.xlu0 0
        %1235 = vperm.xlu0 %1234, %v1230
        %v1236 = vpop.permute.xlu0 %1235
        %1239 = vset.pattern.permute.xlu0 0
        %1240 = vperm.xlu0 %1239, %v1231
        %v1241 = vpop.permute.xlu0 %1240
        %1244 = vset.pattern.permute.xlu0 0
        %1245 = vperm.xlu0 %1244, %v1232
        %v1246 = vpop.permute.xlu0 %1245
        %vm1248 = vcmask 261120
        %v1250 = vsel %vm1248, %v1227, 0
        %v1253 = vsel %vm1248, %v1228, 0
        %v1256 = vsel %vm1248, %v1229, 0
        %1258 = vmatprep.subr.mxu0 %v1212
        %1259 = vmatpush1.msra.mxu0 %v1211
        %1260 = vmatprep.subr.mxu0 %v1216
        %1261 = vmatpush1.msra.mxu0 %v1215
        %1262 = vmatprep.subr.mxu0 %v1220
        %1263 = vmatpush1.msra.mxu0 %v1219
        %1264 = vmatprep.subr.mxu0 %v1224
        %1265 = vmatpush1.msra.mxu0 %v1223
        %1266 = vmatprep.subr.mxu0 0.0
        %1267 = vmatpush1.msra.mxu0 0.0
        %1268 = vmatprep.subr.mxu0 0.0
        %1269 = vmatpush1.msra.mxu0 0.0
        %1270 = vmatprep.subr.mxu0 0.0
        %1271 = vmatpush1.msra.mxu0 0.0
        %1272 = vmatprep.subr.mxu0 0.0
        %1273 = vmatpush1.msra.mxu0 0.0
        %1274 = vmatprep.subr.mxu0 0.0
        %1275 = vmatpush1.msra.mxu0 0.0
        %1276 = vmatprep.subr.mxu0 0.0
        %1277 = vmatpush1.msra.mxu0 0.0
        %1278 = vmatprep.subr.mxu0 0.0
        %1279 = vmatpush1.msra.mxu0 0.0
        %1280 = vmatprep.subr.mxu0 0.0
        %1281 = vmatpush1.msra.mxu0 0.0
        %1282 = vmatprep.subr.mxu0 0.0
        %1283 = vmatpush1.msra.mxu0 0.0
        %1284 = vmatprep.subr.mxu0 0.0
        %1285 = vmatpush1.msra.mxu0 0.0
        %1286 = vmatprep.subr.mxu0 0.0
        %1287 = vmatpush1.msra.mxu0 0.0
        %1288 = vmatprep.subr.mxu0 0.0
        %1289 = vmatpush1.msra.mxu0 0.0
        %1290 = vmatprep.subr.mxu0 0.0
        %1291 = vmatpush1.msra.mxu0 0.0
        %1292 = vmatprep.subr.mxu0 0.0
        %1293 = vmatpush1.msra.mxu0 0.0
        %1294 = vmatprep.subr.mxu0 0.0
        %1295 = vmatpush1.msra.mxu0 0.0
        %1296 = vmatprep.subr.mxu0 0.0
        %1297 = vmatpush1.msra.mxu0 0.0
        %1298 = vmatprep.subr.mxu0 0.0
        %1299 = vmatpush1.msra.mxu0 0.0
        %1300 = vmatprep.subr.mxu0 0.0
        %1301 = vmatpush1.msra.mxu0 0.0
        %1302 = vmatprep.subr.mxu0 0.0
        %1303 = vmatpush1.msra.mxu0 0.0
        %1304 = vmatprep.subr.mxu0 0.0
        %1305 = vmatpush1.msra.mxu0 0.0
        %1306 = vmatprep.subr.mxu0 0.0
        %1307 = vmatpush1.msra.mxu0 0.0
        %1308 = vmatprep.subr.mxu0 0.0
        %1309 = vmatpush1.msra.mxu0 0.0
        %1310 = vmatprep.subr.mxu0 0.0
        %1311 = vmatpush1.msra.mxu0 0.0
        %1312 = vmatprep.subr.mxu0 0.0
        %1313 = vmatpush1.msra.mxu0 0.0
        %1314 = vmatprep.subr.mxu0 0.0
        %1315 = vmatpush1.msra.mxu0 0.0
        %1316 = vmatprep.subr.mxu0 0.0
        %1317 = vmatpush1.msra.mxu0 0.0
        %1318 = vmatprep.subr.mxu0 0.0
        %1319 = vmatpush1.msra.mxu0 0.0
        %1320 = vmatprep.subr.mxu0 0.0
        %1321 = vmatpush1.msra.mxu0 0.0
        %1322 = vmatprep.mubr.f32.mxu0 0.0
        %1323 = vmatmul.mubr.f32.gmra.mrb[0].mxu0 %v1250
        %v1324 = vpop.f32.mrb[0].mxu0
        %v1325 = vadd.f32 %v1236, %v1324
        %v1326 = vpop.f32.mrb[0].mxu0
        %v1327 = vadd.f32 %v1236, %v1326
        %1328 = vmatprep.mubr.f32.mxu0 0.0
        %1329 = vmatmul.mubr.f32.gmra.mrb[0].mxu0 %v1253
        %v1330 = vpop.f32.mrb[0].mxu0
        %v1331 = vadd.f32 %v1241, %v1330
        %v1332 = vpop.f32.mrb[0].mxu0
        %v1333 = vadd.f32 %v1241, %v1332
        %1334 = vmatprep.mubr.f32.mxu0 0.0
        %1335 = vmatmul.mubr.f32.gmra.mrb[0].mxu0 %v1256
        %v1336 = vpop.f32.mrb[0].mxu0
        %v1337 = vadd.f32 %v1246, %v1336
        %v1338 = vpop.f32.mrb[0].mxu0
        %v1339 = vadd.f32 %v1246, %v1338
        %1340 = vdwg.mxu0
        %1341 = vmatprep.subr.mxu0 %v1214
        %1342 = vmatpush1.msra.mxu0 %v1213
        %1343 = vmatprep.subr.mxu0 %v1218
        %1344 = vmatpush1.msra.mxu0 %v1217
        %1345 = vmatprep.subr.mxu0 %v1222
        %1346 = vmatpush1.msra.mxu0 %v1221
        %1347 = vmatprep.subr.mxu0 %v1226
        %1348 = vmatpush1.msra.mxu0 %v1225
        %1349 = vmatprep.subr.mxu0 0.0
        %1350 = vmatpush1.msra.mxu0 0.0
        %1351 = vmatprep.subr.mxu0 0.0
        %1352 = vmatpush1.msra.mxu0 0.0
        %1353 = vmatprep.subr.mxu0 0.0
        %1354 = vmatpush1.msra.mxu0 0.0
        %1355 = vmatprep.subr.mxu0 0.0
        %1356 = vmatpush1.msra.mxu0 0.0
        %1357 = vmatprep.subr.mxu0 0.0
        %1358 = vmatpush1.msra.mxu0 0.0
        %1359 = vmatprep.subr.mxu0 0.0
        %1360 = vmatpush1.msra.mxu0 0.0
        %1361 = vmatprep.subr.mxu0 0.0
        %1362 = vmatpush1.msra.mxu0 0.0
        %1363 = vmatprep.subr.mxu0 0.0
        %1364 = vmatpush1.msra.mxu0 0.0
        %1365 = vmatprep.subr.mxu0 0.0
        %1366 = vmatpush1.msra.mxu0 0.0
        %1367 = vmatprep.subr.mxu0 0.0
        %1368 = vmatpush1.msra.mxu0 0.0
        %1369 = vmatprep.subr.mxu0 0.0
        %1370 = vmatpush1.msra.mxu0 0.0
        %1371 = vmatprep.subr.mxu0 0.0
        %1372 = vmatpush1.msra.mxu0 0.0
        %1373 = vmatprep.subr.mxu0 0.0
        %1374 = vmatpush1.msra.mxu0 0.0
        %1375 = vmatprep.subr.mxu0 0.0
        %1376 = vmatpush1.msra.mxu0 0.0
        %1377 = vmatprep.subr.mxu0 0.0
        %1378 = vmatpush1.msra.mxu0 0.0
        %1379 = vmatprep.subr.mxu0 0.0
        %1380 = vmatpush1.msra.mxu0 0.0
        %1381 = vmatprep.subr.mxu0 0.0
        %1382 = vmatpush1.msra.mxu0 0.0
        %1383 = vmatprep.subr.mxu0 0.0
        %1384 = vmatpush1.msra.mxu0 0.0
        %1385 = vmatprep.subr.mxu0 0.0
        %1386 = vmatpush1.msra.mxu0 0.0
        %1387 = vmatprep.subr.mxu0 0.0
        %1388 = vmatpush1.msra.mxu0 0.0
        %1389 = vmatprep.subr.mxu0 0.0
        %1390 = vmatpush1.msra.mxu0 0.0
        %1391 = vmatprep.subr.mxu0 0.0
        %1392 = vmatpush1.msra.mxu0 0.0
        %1393 = vmatprep.subr.mxu0 0.0
        %1394 = vmatpush1.msra.mxu0 0.0
        %1395 = vmatprep.subr.mxu0 0.0
        %1396 = vmatpush1.msra.mxu0 0.0
        %1397 = vmatprep.subr.mxu0 0.0
        %1398 = vmatpush1.msra.mxu0 0.0
        %1399 = vmatprep.subr.mxu0 0.0
        %1400 = vmatpush1.msra.mxu0 0.0
        %1401 = vmatprep.subr.mxu0 0.0
        %1402 = vmatpush1.msra.mxu0 0.0
        %1403 = vmatprep.subr.mxu0 0.0
        %1404 = vmatpush1.msra.mxu0 0.0
        %1405 = vmatprep.mubr.f32.mxu0 0.0
        %1406 = vmatmul.mubr.f32.gmra.mrb[0].mxu0 %v1250
        %v1407 = vpop.f32.mrb[0].mxu0
        %v1408 = vadd.f32 %v1236, %v1407
        %v1409 = vpop.f32.mrb[0].mxu0
        %v1410 = vadd.f32 %v1236, %v1409
        %1411 = vmatprep.mubr.f32.mxu0 0.0
        %1412 = vmatmul.mubr.f32.gmra.mrb[0].mxu0 %v1253
        %v1413 = vpop.f32.mrb[0].mxu0
        %v1414 = vadd.f32 %v1241, %v1413
        %v1415 = vpop.f32.mrb[0].mxu0
        %v1416 = vadd.f32 %v1241, %v1415
        %1417 = vmatprep.mubr.f32.mxu0 0.0
        %1418 = vmatmul.mubr.f32.gmra.mrb[0].mxu0 %v1256
        %v1419 = vpop.f32.mrb[0].mxu0
        %v1420 = vadd.f32 %v1246, %v1419
        %v1421 = vpop.f32.mrb[0].mxu0
        %v1422 = vadd.f32 %v1246, %v1421
        %1423 = vdwg.mxu0
        %1424 = vst [vmem:[%s382] sm:$0xff] %v1325
        %1425 = vst [vmem:[%s382 + $0x8] sm:$0xff] %v1327
        %1426 = vst [vmem:[%s382 + $0x10] sm:$0xff] %v1408
        %1427 = vst [vmem:[%s382 + $0x18] sm:$0xff] %v1410
        %1428 = vst [vmem:[%s382 + $0x20] sm:$0xff] %v1331
        %1429 = vst [vmem:[%s382 + $0x28] sm:$0xff] %v1333
        %1430 = vst [vmem:[%s382 + $0x30] sm:$0xff] %v1414
        %1431 = vst [vmem:[%s382 + $0x38] sm:$0xff] %v1416
        %v1432 = vld [vmem:[#allocation2] sm:$0xff]
        %v1433 = vld [vmem:[#allocation2 + $0x8] sm:$0xff]
        %v1434 = vld [vmem:[#allocation2 + $0x10] sm:$0x1]
        %1435 = vmatprep.subr.mxu0 %v672
        %1436 = vmatpush1.xpose.msra.mxu0 %v671
        %1437 = vmatprep.subr.mxu0 %v676
        %1438 = vmatpush1.xpose.msra.mxu0 %v675
        %1439 = vmatprep.subr.mxu0 %v680
        %1440 = vmatpush1.xpose.msra.mxu0 %v679
        %1441 = vmatprep.subr.mxu0 %v684
        %1442 = vmatpush1.xpose.msra.mxu0 %v683
        %1443 = vmatprep.subr.mxu0 %v688
        %1444 = vmatpush1.xpose.msra.mxu0 %v687
        %1445 = vmatprep.subr.mxu0 %v692
        %1446 = vmatpush1.xpose.msra.mxu0 %v691
        %1447 = vmatprep.subr.mxu0 %v696
        %1448 = vmatpush1.xpose.msra.mxu0 %v695
        %1449 = vmatprep.subr.mxu0 %v700
        %1450 = vmatpush1.xpose.msra.mxu0 %v699
        %1451 = vmatprep.subr.mxu0 0.0
        %1452 = vmatpush1.xpose.msra.mxu0 0.0
        %1453 = vmatprep.subr.mxu0 0.0
        %1454 = vmatpush1.xpose.msra.mxu0 0.0
        %1455 = vmatprep.subr.mxu0 0.0
        %1456 = vmatpush1.xpose.msra.mxu0 0.0
        %1457 = vmatprep.subr.mxu0 0.0
        %1458 = vmatpush1.xpose.msra.mxu0 0.0
        %1459 = vmatprep.subr.mxu0 0.0
        %1460 = vmatpush1.xpose.msra.mxu0 0.0
        %1461 = vmatprep.subr.mxu0 0.0
        %1462 = vmatpush1.xpose.msra.mxu0 0.0
        %1463 = vmatprep.subr.mxu0 0.0
        %1464 = vmatpush1.xpose.msra.mxu0 0.0
        %1465 = vmatprep.subr.mxu0 0.0
        %1466 = vmatpush1.xpose.msra.mxu0 0.0
        %1467 = vmatprep.subr.mxu0 0.0
        %1468 = vmatpush1.xpose.msra.mxu0 0.0
        %1469 = vmatprep.subr.mxu0 0.0
        %1470 = vmatpush1.xpose.msra.mxu0 0.0
        %1471 = vmatprep.subr.mxu0 0.0
        %1472 = vmatpush1.xpose.msra.mxu0 0.0
        %1473 = vmatprep.subr.mxu0 0.0
        %1474 = vmatpush1.xpose.msra.mxu0 0.0
        %1475 = vmatprep.subr.mxu0 0.0
        %1476 = vmatpush1.xpose.msra.mxu0 0.0
        %1477 = vmatprep.subr.mxu0 0.0
        %1478 = vmatpush1.xpose.msra.mxu0 0.0
        %1479 = vmatprep.subr.mxu0 0.0
        %1480 = vmatpush1.xpose.msra.mxu0 0.0
        %1481 = vmatprep.subr.mxu0 0.0
        %1482 = vmatpush1.xpose.msra.mxu0 0.0
        %1483 = vmatprep.subr.mxu0 0.0
        %1484 = vmatpush1.xpose.msra.mxu0 0.0
        %1485 = vmatprep.subr.mxu0 0.0
        %1486 = vmatpush1.xpose.msra.mxu0 0.0
        %1487 = vmatprep.subr.mxu0 0.0
        %1488 = vmatpush1.xpose.msra.mxu0 0.0
        %1489 = vmatprep.subr.mxu0 0.0
        %1490 = vmatpush1.xpose.msra.mxu0 0.0
        %1491 = vmatprep.subr.mxu0 0.0
        %1492 = vmatpush1.xpose.msra.mxu0 0.0
        %1493 = vmatprep.subr.mxu0 0.0
        %1494 = vmatpush1.xpose.msra.mxu0 0.0
        %1495 = vmatprep.subr.mxu0 0.0
        %1496 = vmatpush1.xpose.msra.mxu0 0.0
        %1497 = vmatprep.subr.mxu0 0.0
        %1498 = vmatpush1.xpose.msra.mxu0 0.0
        %1499 = vmatprep.mubr.f32.mxu0 %v1327
        %1500 = vmatmul.mubr.f32.gmra.mrb[0].mxu0 %v1325
        %v1501 = vpop.f32.mrb[0].mxu0
        %v1502 = vadd.f32 0.0, %v1501
        %v1503 = vpop.f32.mrb[0].mxu0
        %1504 = vmatprep.mubr.f32.mxu0 %v1333
        %1505 = vmatmul.mubr.f32.gmra.mrb[0].mxu0 %v1331
        %v1506 = vpop.f32.mrb[0].mxu0
        %v1507 = vadd.f32 0.0, %v1506
        %v1508 = vpop.f32.mrb[0].mxu0
        %1509 = vmatprep.mubr.f32.mxu0 %v1339
        %1510 = vmatmul.mubr.f32.gmra.mrb[0].mxu0 %v1337
        %v1511 = vpop.f32.mrb[0].mxu0
        %v1512 = vadd.f32 0.0, %v1511
        %v1513 = vpop.f32.mrb[0].mxu0
        %1514 = vdwg.mxu0
        %1515 = vmatprep.subr.mxu0 %v674
        %1516 = vmatpush1.xpose.msra.mxu0 %v673
        %1517 = vmatprep.subr.mxu0 %v678
        %1518 = vmatpush1.xpose.msra.mxu0 %v677
        %1519 = vmatprep.subr.mxu0 %v682
        %1520 = vmatpush1.xpose.msra.mxu0 %v681
        %1521 = vmatprep.subr.mxu0 %v686
        %1522 = vmatpush1.xpose.msra.mxu0 %v685
        %1523 = vmatprep.subr.mxu0 %v690
        %1524 = vmatpush1.xpose.msra.mxu0 %v689
        %1525 = vmatprep.subr.mxu0 %v694
        %1526 = vmatpush1.xpose.msra.mxu0 %v693
        %1527 = vmatprep.subr.mxu0 %v698
        %1528 = vmatpush1.xpose.msra.mxu0 %v697
        %1529 = vmatprep.subr.mxu0 %v702
        %1530 = vmatpush1.xpose.msra.mxu0 %v701
        %1531 = vmatprep.subr.mxu0 0.0
        %1532 = vmatpush1.xpose.msra.mxu0 0.0
        %1533 = vmatprep.subr.mxu0 0.0
        %1534 = vmatpush1.xpose.msra.mxu0 0.0
        %1535 = vmatprep.subr.mxu0 0.0
        %1536 = vmatpush1.xpose.msra.mxu0 0.0
        %1537 = vmatprep.subr.mxu0 0.0
        %1538 = vmatpush1.xpose.msra.mxu0 0.0
        %1539 = vmatprep.subr.mxu0 0.0
        %1540 = vmatpush1.xpose.msra.mxu0 0.0
        %1541 = vmatprep.subr.mxu0 0.0
        %1542 = vmatpush1.xpose.msra.mxu0 0.0
        %1543 = vmatprep.subr.mxu0 0.0
        %1544 = vmatpush1.xpose.msra.mxu0 0.0
        %1545 = vmatprep.subr.mxu0 0.0
        %1546 = vmatpush1.xpose.msra.mxu0 0.0
        %1547 = vmatprep.subr.mxu0 0.0
        %1548 = vmatpush1.xpose.msra.mxu0 0.0
        %1549 = vmatprep.subr.mxu0 0.0
        %1550 = vmatpush1.xpose.msra.mxu0 0.0
        %1551 = vmatprep.subr.mxu0 0.0
        %1552 = vmatpush1.xpose.msra.mxu0 0.0
        %1553 = vmatprep.subr.mxu0 0.0
        %1554 = vmatpush1.xpose.msra.mxu0 0.0
        %1555 = vmatprep.subr.mxu0 0.0
        %1556 = vmatpush1.xpose.msra.mxu0 0.0
        %1557 = vmatprep.subr.mxu0 0.0
        %1558 = vmatpush1.xpose.msra.mxu0 0.0
        %1559 = vmatprep.subr.mxu0 0.0
        %1560 = vmatpush1.xpose.msra.mxu0 0.0
        %1561 = vmatprep.subr.mxu0 0.0
        %1562 = vmatpush1.xpose.msra.mxu0 0.0
        %1563 = vmatprep.subr.mxu0 0.0
        %1564 = vmatpush1.xpose.msra.mxu0 0.0
        %1565 = vmatprep.subr.mxu0 0.0
        %1566 = vmatpush1.xpose.msra.mxu0 0.0
        %1567 = vmatprep.subr.mxu0 0.0
        %1568 = vmatpush1.xpose.msra.mxu0 0.0
        %1569 = vmatprep.subr.mxu0 0.0
        %1570 = vmatpush1.xpose.msra.mxu0 0.0
        %1571 = vmatprep.subr.mxu0 0.0
        %1572 = vmatpush1.xpose.msra.mxu0 0.0
        %1573 = vmatprep.subr.mxu0 0.0
        %1574 = vmatpush1.xpose.msra.mxu0 0.0
        %1575 = vmatprep.subr.mxu0 0.0
        %1576 = vmatpush1.xpose.msra.mxu0 0.0
        %1577 = vmatprep.subr.mxu0 0.0
        %1578 = vmatpush1.xpose.msra.mxu0 0.0
        %1579 = vmatprep.mubr.f32.mxu0 %v1410
        %1580 = vmatmul.mubr.f32.gmra.mrb[0].mxu0 %v1408
        %v1581 = vpop.f32.mrb[0].mxu0
        %v1582 = vadd.f32 %v1502, %v1581
        %v1583 = vpop.f32.mrb[0].mxu0
        %1584 = vmatprep.mubr.f32.mxu0 %v1416
        %1585 = vmatmul.mubr.f32.gmra.mrb[0].mxu0 %v1414
        %v1586 = vpop.f32.mrb[0].mxu0
        %v1587 = vadd.f32 %v1507, %v1586
        %v1588 = vpop.f32.mrb[0].mxu0
        %1589 = vmatprep.mubr.f32.mxu0 %v1422
        %1590 = vmatmul.mubr.f32.gmra.mrb[0].mxu0 %v1420
        %v1591 = vpop.f32.mrb[0].mxu0
        %v1592 = vadd.f32 %v1512, %v1591
        %v1593 = vpop.f32.mrb[0].mxu0
        %1594 = vdwg.mxu0
        %v1595 = vadd.f32 %v1432, %v1582
        %v1596 = vadd.f32 %v1433, %v1587
        %v1597 = vadd.f32 %v1434, %v1592
        %1598 = vst.msk [vmem:[#allocation2] sm:$0xff] %vm721, %v1595
        %1599 = vst.msk [vmem:[#allocation2 + $0x8] sm:$0xff] %vm721, %v1596
        %vm1600 = vcmask 516096
        %1601 = vst.msk [vmem:[#allocation2 + $0x10] sm:$0x1] %vm1600, %v1597
        %p1602 = scmp.eq.s32.totalorder %s26, 1
        // Predicated region
        $region57: #{edge_node_mp.1} parent=51 // pred_check
          %p1603 = pneg %p1602
        $region58: #{edge_node_mp.1} parent=51 // pred_check_branch
          %1605 = sbr.rel (%p1603) target = $region60
        $region59: #{edge_node_mp.1} parent=51 // pred_region
          %v1606 = vld [vmem:[#allocation2] sm:$0xff]
          %v1607 = vld [vmem:[#allocation2 + $0x8] sm:$0xff]
          %v1608 = vld [vmem:[#allocation2 + $0x10] sm:$0x1]
          %1609 = vst.msk [vmem:[%s407] sm:$0xff] %vm721, %v1606
          %1610 = vst.msk [vmem:[%s407 + $0x8] sm:$0xff] %vm721, %v1607
          %1611 = vst.msk [vmem:[%s407 + $0x10] sm:$0x1] %vm1600, %v1608
        $region60: #{edge_node_mp.1} parent=51 // pred_fallthru
          _
        %p1612 = scmp.lt.s32.totalorder %s25, 1
        %s1613 = scalar_select %p1612, %s25, 1
        %s1614 = smul.addr %s1613, 3
        %s1615 = smul.addr %s1614, 8
        %s1616 = scalar_lea.vmem %s8, %s1615
        %s1617 = sand.u32 %s257, 1
        %s1618 = sand.u32 %s257, 1
        %s1619 = smul.addr %s1618, 64
        %s1620 = scalar_lea.vmem [#allocation3], %s1619
        // Predicated region
        $region61: #{edge_node_mp.1} parent=51 // pred_check
          %p1621 = pneg %p237
        $region62: #{edge_node_mp.1} parent=51 // pred_check_branch
          %1623 = sbr.rel (%p1621) target = $region64
        $region63: #{edge_node_mp.1} parent=51 // pred_region
          _
        $region64: #{edge_node_mp.1} parent=51 // pred_fallthru
          _
        // Predicated region
        $region65: #{edge_node_mp.1} parent=51 // pred_check
          %p1624 = pneg %p267
        $region66: #{edge_node_mp.1} parent=51 // pred_check_branch
          %1626 = sbr.rel (%p1624) target = $region68
        $region67: #{edge_node_mp.1} parent=51 // pred_region
          %s1627 = smul.u32 %s25, 2
          %s1628 = sadd.s32 %s1627, %s26
          %s1629 = smul.u32 4, %s1628
          %s1630 = smul.addr %s1629, 8
          %s1631 = scalar_lea.vmem %s9, %s1630
          // Predicated region
          $region69: #{edge_node_mp.1} parent=67 // pred_check
            _
          $region70: #{edge_node_mp.1} parent=67 // pred_check_branch
            %1633 = sbr.rel (0) target = $region72
          $region71: #{edge_node_mp.1} parent=67 // pred_region
            // Predicated region
            $region73: #{edge_node_mp.1} parent=71 // pred_check
              _
            $region74: #{edge_node_mp.1} parent=71 // pred_check_branch
              %1635 = sbr.rel (0) target = $region76
            $region75: #{edge_node_mp.1} parent=71 // pred_region
              loop: start=0, step=1, limit=1
              $region77: #{edge_node_mp.1} parent=75 // loop_pre_header
                _
              $region78: #{edge_node_mp.1} parent=75 // loop_header
                %s1637 = sphi 0, %s1641
                %p1638 = scmp.ge.s32.totalorder %s1637, 1
                %s1642 = sphi %s1620, %s1620
                %s1643 = sphi %s1631, %s1631
              $region79: #{edge_node_mp.1} parent=75 // loop_header_branch
                %1640 = sbr.rel (%p1638) target = $region83
              $region80: #{edge_node_mp.1} parent=75 // loop_body
                %v1644 = vld [vmem:[%s1642] sm:$0xff]
                %1645 = vst [vmem:[%s1643] sm:$0xff] %v1644
                %v1646 = vld [vmem:[%s1642 + $0x8] sm:$0xff]
                %1647 = vst [vmem:[%s1643 + $0x8] sm:$0xff] %v1646
                %v1648 = vld [vmem:[%s1642 + $0x10] sm:$0xff]
                %1649 = vst [vmem:[%s1643 + $0x10] sm:$0xff] %v1648
                %v1650 = vld [vmem:[%s1642 + $0x18] sm:$0xff]
                %1651 = vst [vmem:[%s1643 + $0x18] sm:$0xff] %v1650
                %v1652 = vld [vmem:[%s1642 + $0x20] sm:$0xff]
                %1653 = vst [vmem:[%s1643 + $0x80] sm:$0xff] %v1652
                %v1654 = vld [vmem:[%s1642 + $0x28] sm:$0xff]
                %1655 = vst [vmem:[%s1643 + $0x88] sm:$0xff] %v1654
                %v1656 = vld [vmem:[%s1642 + $0x30] sm:$0xff]
                %1657 = vst [vmem:[%s1643 + $0x90] sm:$0xff] %v1656
                %v1658 = vld [vmem:[%s1642 + $0x38] sm:$0xff]
                %1659 = vst [vmem:[%s1643 + $0x98] sm:$0xff] %v1658
              $region81: #{edge_node_mp.1} parent=75 // loop_footer
                %s1641 = sadd.s32 1, %s1637
              $region82: #{edge_node_mp.1} parent=75 // loop_footer_branch
                %1636 = sbr.rel target = $region78
              $region83: #{edge_node_mp.1} parent=75 // loop_exit
                _
            $region76: #{edge_node_mp.1} parent=71 // pred_fallthru
              _
            // Predicated region
            $region84: #{edge_node_mp.1} parent=71 // pred_check
              _
            $region85: #{edge_node_mp.1} parent=71 // pred_check_branch
              %1661 = sbr.rel target = $region87
            $region86: #{edge_node_mp.1} parent=71 // pred_region
              _
            $region87: #{edge_node_mp.1} parent=71 // pred_fallthru
              _
          $region72: #{edge_node_mp.1} parent=67 // pred_fallthru
            _
          %1662 = vnop
        $region68: #{edge_node_mp.1} parent=51 // pred_fallthru
          _
      $region52: #{edge_node_mp.1} parent=5 // pred_fallthru
        _
      %p1663 = scmp.le.s32.totalorder 2, %s16
      // Predicated region
      $region88: #{edge_node_mp.1} parent=5 // pred_check
        %p1664 = pneg %p1663
      $region89: #{edge_node_mp.1} parent=5 // pred_check_branch
        %1666 = sbr.rel (%p1664) target = $region91
      $region90: #{edge_node_mp.1} parent=5 // pred_region
        %s1667 = ssub.s32 %s16, 2
        // Predicated region
        $region92: #{edge_node_mp.1} parent=90 // pred_check
          %p1668 = pneg %p243
        $region93: #{edge_node_mp.1} parent=90 // pred_check_branch
          %1670 = sbr.rel (%p1668) target = $region95
        $region94: #{edge_node_mp.1} parent=90 // pred_region
          %p1671 = scmp.lt.s32.totalorder %s27, 1
          %s1672 = scalar_select %p1671, %s27, 1
          %s1673 = smul.addr %s1672, 3
          %s1674 = smul.addr %s1673, 8
          %s1675 = scalar_lea.vmem %s8, %s1674
        $region95: #{edge_node_mp.1} parent=90 // pred_fallthru
          _
        // Predicated region
        $region96: #{edge_node_mp.1} parent=90 // pred_check
          %p1676 = pneg %p273
        $region97: #{edge_node_mp.1} parent=90 // pred_check_branch
          %1678 = sbr.rel (%p1676) target = $region99
        $region98: #{edge_node_mp.1} parent=90 // pred_region
          %s1679 = sand.u32 %s258, 1
          %s1680 = sand.u32 %s258, 1
          %s1681 = smul.addr %s1680, 64
          %s1682 = scalar_lea.vmem [#allocation3], %s1681
        $region99: #{edge_node_mp.1} parent=90 // pred_fallthru
          _
      $region91: #{edge_node_mp.1} parent=5 // pred_fallthru
        _
    $region6: #{edge_node_mp.1} parent=1 // loop_footer
      %s20 = sadd.s32 1, %s16
    $region7: #{edge_node_mp.1} parent=1 // loop_footer_branch
      %15 = sbr.rel target = $region3
    $region8: #{edge_node_mp.1} parent=1 // loop_exit
      _

</llo_original>
